<compile_context>
chip_gen: v6e
topology: v6e:2x2x1
jax: 0.10.0
libtpu: 0.0.40
codegen_flags: <defaults>
</compile_context>

<pallas_src>
import math
import functools

import jax
import jax.numpy as jnp
from jax import lax
from jax.experimental import pallas as pl
from jax.experimental.pallas import tpu as pltpu


# --------------------------------------------------------------------------------------
# Kernels
# --------------------------------------------------------------------------------------

def kv_proj_kernel(x_ref, wkv_ref, bkv_ref, ck_ref, sk_ref,
                   kv_ref, krot_ref, v_ref, *, num_head, head_size):
    """K/V projection + K RoPE for one (batch, seq-tile) block.

    x_ref    : (1, T, D)  bf16
    wkv_ref  : (D, 2D)    bf16   (split-half column layout per head)
    bkv_ref  : (1, 2D)    f32
    ck/sk    : (T, hs/2)  f32
    kv_ref   : (2, 1, T, D)      un-rotated k, v (next_prefix_kv, split-half layout)
    krot_ref : (1, T, D)  bf16   rotated K
    v_ref    : (1, T, D)  bf16   V
    """
    hs = head_size
    hs2 = hs // 2
    D = num_head * hs

    kvp = jnp.dot(x_ref[0], wkv_ref[...],
                  preferred_element_type=jnp.float32) + bkv_ref[...]     # (T, 2D) f32
    k_f = kvp[:, :D]
    v_f = kvp[:, D:]

    kv_ref[0, 0] = k_f.astype(kv_ref.dtype)
    kv_ref[1, 0] = v_f.astype(kv_ref.dtype)
    v_ref[0] = v_f.astype(v_ref.dtype)

    ck = ck_ref[...]
    sk = sk_ref[...]
    for h in range(num_head):
        ke = k_f[:, h * hs:h * hs + hs2]
        ko = k_f[:, h * hs + hs2:(h + 1) * hs]
        # split-half RoPE: [c*e - s*o | c*o + s*e] -- two sliced stores, no concatenate.
        krot_ref[0, :, h * hs:h * hs + hs2] = (ck * ke - sk * ko).astype(krot_ref.dtype)
        krot_ref[0, :, h * hs + hs2:(h + 1) * hs] = (ck * ko + sk * ke).astype(krot_ref.dtype)


def attn_kernel(x_ref, wq_ref, bq_ref, cq_ref, sq_ref,
                k_ref, v_ref, bias_ref, wf_ref, bf_ref,
                o_ref,
                qrot_scr, attn_scr,
                *, num_head, head_size, exp_in_bf16):
    """Q projection + Q RoPE + masked softmax attention + output projection
    for one (batch, q-tile) block.  K/V are pre-rotated / pre-projected inputs."""
    hs = head_size
    hs2 = hs // 2

    q_f = jnp.dot(x_ref[0], wq_ref[...],
                  preferred_element_type=jnp.float32) + bq_ref[...]      # (TQ, D) f32

    cq = cq_ref[...]                      # (TQ, hs/2) f32 -- 1/sqrt(hs) already folded in
    sq = sq_ref[...]
    bias = bias_ref[...].astype(jnp.float32)                             # (TQ, S)
    k_rot = k_ref[0]                                                     # (S, D) bf16
    v_all = v_ref[0]                                                     # (S, D) bf16

    for h in range(num_head):
        qe = q_f[:, h * hs:h * hs + hs2]
        qo = q_f[:, h * hs + hs2:(h + 1) * hs]
        qrot_scr[:, h * hs:h * hs + hs2] = (cq * qe - sq * qo).astype(qrot_scr.dtype)
        qrot_scr[:, h * hs + hs2:(h + 1) * hs] = (cq * qo + sq * qe).astype(qrot_scr.dtype)
        q_rot = qrot_scr[:, h * hs:(h + 1) * hs]                         # (TQ, hs) bf16
        k_h = k_rot[:, h * hs:(h + 1) * hs]                              # (S, hs) bf16

        s = lax.dot_general(q_rot, k_h, (((1,), (1,)), ((), ())),
                            preferred_element_type=jnp.float32) + bias   # (TQ, S) f32
        m = jnp.max(s, axis=-1, keepdims=True)
        d = s - m
        if exp_in_bf16:
            e = jnp.exp(d.astype(jnp.bfloat16)).astype(jnp.float32)
        else:
            e = jnp.exp(d)
        p = (e * pl.reciprocal(jnp.sum(e, axis=-1, keepdims=True), approx=True)
             ).astype(jnp.bfloat16)
        o_h = jnp.dot(p, v_all[:, h * hs:(h + 1) * hs],
                      preferred_element_type=jnp.float32)                # (TQ, hs)
        attn_scr[:, h * hs:(h + 1) * hs] = o_h.astype(attn_scr.dtype)

    out = jnp.dot(attn_scr[...], wf_ref[...],
                  preferred_element_type=jnp.float32) + bf_ref[...]      # (TQ, D)
    o_ref[0] = out.astype(o_ref.dtype)


# --------------------------------------------------------------------------------------
# Host-side helpers
# --------------------------------------------------------------------------------------

def _tpu_generation():
    try:
        kind = jax.devices()[0].device_kind.lower()
    except Exception:
        return None
    for g in (7, 6, 5, 4):
        if (f"v{g}" in kind) or (f"tpu{g}" in kind):
            return g
    return None


def _vmem_capacity_bytes(gen):
    try:
        return int(pltpu.get_tpu_info().vmem_capacity_bytes)
    except Exception:
        return (64 << 20) if gen == 7 else (128 << 20)


def _pick_q_tile(seq_len, gen):
    """Generation-aware q tile; pads seq to a multiple of the tile when needed."""
    target = 512 if gen in (5, 6) else 256
    if seq_len <= target:
        return seq_len, seq_len
    s_pad = -(-seq_len // 128) * 128
    tile = target
    while s_pad % tile != 0:
        tile -= 128
    return tile, s_pad


def _bytes(shape, dtype):
    n = 1
    for d in shape:
        n *= d
    return n * jnp.dtype(dtype).itemsize


def _vmem_limit(block_bytes, scratch_bytes, capacity):
    est = sum(2 * b for b in block_bytes) + scratch_bytes
    est = int(est * 1.25) + (8 << 20)
    return max(32 << 20, min(est, int(capacity * 0.9)))


def _split_half_cols(w, num_head, hs):
    """Permute the last dim from per-head interleaved (even,odd) to per-head [evens | odds]."""
    lead = w.shape[:-1]
    d = w.shape[-1]
    w = w.reshape(*lead, num_head, hs // 2, 2)
    w = jnp.swapaxes(w, -1, -2)
    return w.reshape(*lead, d)


# --------------------------------------------------------------------------------------
# Forward
# --------------------------------------------------------------------------------------

def _rope_mha_forward(x, wp, bp, wf, bf, freq_cis_q, freq_cis_k, mask, num_head,
                      *, single_buffer_constants):
    B, S, D = x.shape
    hs = D // num_head
    assert hs % 2 == 0
    hs2 = hs // 2
    f32, b16 = jnp.float32, jnp.bfloat16
    out_dtype = x.dtype

    gen = _tpu_generation()
    vmem_cap = _vmem_capacity_bytes(gen)
    tq, s_pad = _pick_q_tile(S, gen)
    exp_in_bf16 = gen in (6, 7)          # keep f32 exp on v5e / unknown

    # ---- host-side parameter prep: split-half column permutation (reshape-based), bf16 ----
    wq = _split_half_cols(wp[:, :D], num_head, hs).astype(b16)
    wkv = jnp.concatenate([_split_half_cols(wp[:, D:2 * D], num_head, hs),
                           _split_half_cols(wp[:, 2 * D:], num_head, hs)], axis=1).astype(b16)
    bq = _split_half_cols(bp[:, :D], num_head, hs).astype(f32)
    bkv = jnp.concatenate([_split_half_cols(bp[:, D:2 * D], num_head, hs),
                           _split_half_cols(bp[:, 2 * D:], num_head, hs)], axis=1).astype(f32)
    wf_p = _split_half_cols(wf.T, num_head, hs).T.astype(b16)   # row-permute ff to match
    bf_p = bf.astype(f32)

    # RoPE tables: fold 1/sqrt(hs) into the *query* tables (rotation is linear in c,s).
    scale = 1.0 / math.sqrt(hs)
    cos_q = (jnp.real(freq_cis_q) * scale).astype(f32)
    sin_q = (jnp.imag(freq_cis_q) * scale).astype(f32)
    cos_k = jnp.real(freq_cis_k).astype(f32)
    sin_k = jnp.imag(freq_cis_k).astype(f32)

    # Additive mask bias: 0 where kept, -1e38 where masked.
    bias = jnp.where(mask == 0, f32(-1e38), f32(0.0))

    # ---- pad the sequence axis to a multiple of the q tile ----
    if s_pad != S:
        pad = s_pad - S
        x = jnp.pad(x, ((0, 0), (0, pad), (0, 0)))
        cos_q = jnp.pad(cos_q, ((0, pad), (0, 0)))
        sin_q = jnp.pad(sin_q, ((0, pad), (0, 0)))
        cos_k = jnp.pad(cos_k, ((0, pad), (0, 0)))
        sin_k = jnp.pad(sin_k, ((0, pad), (0, 0)))
        bias = jnp.pad(bias, ((0, pad), (0, pad)))        # padded q rows: keep (no NaN)
        bias = bias.at[:S, S:].set(f32(-1e38))            # padded keys masked for real rows
    bias = bias.astype(b16)
    x_b = x.astype(b16)

    def const_spec(shape):
        nd = len(shape)
        idx = lambda *args: (0,) * nd
        if single_buffer_constants:
            # grid-constant input: single buffer (saves 1x of each weight in VMEM)
            return pl.BlockSpec(shape, idx, pipeline_mode=pl.Buffered(1))
        return pl.BlockSpec(shape, idx)

    grid = (B, s_pad // tq)
    sem = ("parallel", "parallel")

    # ---------------- pass 1: K/V projection + K RoPE ----------------
    kv_blocks = [
        _bytes((1, tq, D), b16), _bytes((D, 2 * D), b16), _bytes((1, 2 * D), f32),
        _bytes((tq, hs2), f32), _bytes((tq, hs2), f32),
        _bytes((2, 1, tq, D), out_dtype), _bytes((1, tq, D), b16), _bytes((1, tq, D), b16),
    ]
    kv_raw, k_rot, v_bf = pl.pallas_call(
        functools.partial(kv_proj_kernel, num_head=num_head, head_size=hs),
        out_shape=(
            jax.ShapeDtypeStruct((2, B, s_pad, D), out_dtype),   # un-rotated k, v
            jax.ShapeDtypeStruct((B, s_pad, D), b16),            # rotated K
            jax.ShapeDtypeStruct((B, s_pad, D), b16),            # V
        ),
        grid=grid,
        in_specs=[
            pl.BlockSpec((1, tq, D), lambda b, si: (b, si, 0)),
            const_spec((D, 2 * D)),
            const_spec((1, 2 * D)),
            pl.BlockSpec((tq, hs2), lambda b, si: (si, 0)),
            pl.BlockSpec((tq, hs2), lambda b, si: (si, 0)),
        ],
        out_specs=(
            pl.BlockSpec((2, 1, tq, D), lambda b, si: (0, b, si, 0)),
            pl.BlockSpec((1, tq, D), lambda b, si: (b, si, 0)),
            pl.BlockSpec((1, tq, D), lambda b, si: (b, si, 0)),
        ),
        compiler_params=pltpu.CompilerParams(
            dimension_semantics=sem,
            vmem_limit_bytes=_vmem_limit(kv_blocks, 0, vmem_cap)),
    )(x_b, wkv, bkv, cos_k, sin_k)

    # ---------------- pass 2: attention (Q proj + RoPE + softmax + PV + ff) ----------------
    attn_blocks = [
        _bytes((1, tq, D), b16), _bytes((D, D), b16), _bytes((1, D), f32),
        _bytes((tq, hs2), f32), _bytes((tq, hs2), f32),
        _bytes((1, s_pad, D), b16), _bytes((1, s_pad, D), b16),
        _bytes((tq, s_pad), b16), _bytes((D, D), b16), _bytes((1, D), f32),
        _bytes((1, tq, D), out_dtype),
    ]
    attn_scratch = 2 * _bytes((tq, D), b16)
    ff_full = pl.pallas_call(
        functools.partial(attn_kernel, num_head=num_head, head_size=hs,
                          exp_in_bf16=exp_in_bf16),
        out_shape=jax.ShapeDtypeStruct((B, s_pad, D), out_dtype),
        grid=grid,
        in_specs=[
            pl.BlockSpec((1, tq, D), lambda b, qi: (b, qi, 0)),      # x q-tile
            const_spec((D, D)),                                      # wq
            const_spec((1, D)),                                      # bq
            pl.BlockSpec((tq, hs2), lambda b, qi: (qi, 0)),          # cos_q (scaled)
            pl.BlockSpec((tq, hs2), lambda b, qi: (qi, 0)),          # sin_q (scaled)
            pl.BlockSpec((1, s_pad, D), lambda b, qi: (b, 0, 0)),    # rotated K
            pl.BlockSpec((1, s_pad, D), lambda b, qi: (b, 0, 0)),    # V
            pl.BlockSpec((tq, s_pad), lambda b, qi: (qi, 0)),        # mask bias (bf16)
            const_spec((D, D)),                                      # wf (row-permuted)
            const_spec((1, D)),                                      # bf
        ],
        out_specs=pl.BlockSpec((1, tq, D), lambda b, qi: (b, qi, 0)),
        scratch_shapes=[pltpu.VMEM((tq, D), b16),                    # rotated Q slab
                        pltpu.VMEM((tq, D), b16)],                   # per-head attn output slab
        compiler_params=pltpu.CompilerParams(
            dimension_semantics=sem,
            vmem_limit_bytes=_vmem_limit(attn_blocks, attn_scratch, vmem_cap)),
    )(x_b, wq, bq, cos_q, sin_q, k_rot, v_bf, bias, wf_p, bf_p)

    ff_o = ff_full[:, :S] if s_pad != S else ff_full
    kv_raw = kv_raw[:, :, :S] if s_pad != S else kv_raw

    # Undo the split-half column permutation with a reshape/transpose un-interleave
    # (no gather) and produce (2, B, H, S, hs).
    next_prefix_kv = (kv_raw.reshape(2, B, S, num_head, 2, hs2)
                      .transpose(0, 1, 3, 2, 5, 4)
                      .reshape(2, B, num_head, S, hs))
    return ff_o, next_prefix_kv


def rope_mha_forward(x, wp, bp, wf, bf, freq_cis_q, freq_cis_k, mask, num_head):
    try:
        return _rope_mha_forward(x, wp, bp, wf, bf, freq_cis_q, freq_cis_k, mask,
                                 num_head, single_buffer_constants=True)
    except Exception:
        # Fallback if this JAX build rejects pl.Buffered(1) single-buffering.
        return _rope_mha_forward(x, wp, bp, wf, bf, freq_cis_q, freq_cis_k, mask,
                                 num_head, single_buffer_constants=False)


# --------------------------------------------------------------------------------------
# Pure-JAX reference (mirrors the PyTorch forward, masked branch, eval mode)
# --------------------------------------------------------------------------------------

def ref_forward(x, wp, bp, wf, bf, fcq, fck, mask, num_head):
    B, S, D = x.shape
    hs = D // num_head
    b16 = jnp.bfloat16

    xp = jnp.dot(x.astype(b16), wp.astype(b16), preferred_element_type=jnp.float32) + bp
    xp = xp.reshape(B, S, 3, num_head, hs).transpose(2, 0, 3, 1, 4)    # (3,B,H,S,hs)
    q, k, v = xp[0], xp[1], xp[2]
    kv = jnp.stack((k, v))                                             # un-rotated

    def rope(t, fc):
        tc = t.reshape(*t.shape[:-1], hs // 2, 2)
        tcx = tc[..., 0] + 1j * tc[..., 1]
        r = fc.reshape(1, 1, S, hs // 2) * tcx
        return jnp.stack((jnp.real(r), jnp.imag(r)), axis=-1).reshape(t.shape)

    qr = rope(q, fcq).astype(b16)
    kr = rope(k, fck).astype(b16)
    s = jnp.einsum('bhqd,bhkd->bhqk', qr, kr,
                   preferred_element_type=jnp.float32) / math.sqrt(hs)
    s = jnp.where(mask == 0, -jnp.finfo(jnp.float32).max, s)
    p = jax.nn.softmax(s, axis=-1).astype(b16)
    o = jnp.einsum('bhqk,bhkd->bhqd', p, v.astype(b16),
                   preferred_element_type=jnp.float32)
    o = o.transpose(0, 2, 1, 3).reshape(B, S, D).astype(b16)
    out = jnp.dot(o, wf.astype(b16), preferred_element_type=jnp.float32) + bf
    return out, kv


# --------------------------------------------------------------------------------------

if __name__ == "__main__":
    B, S, D, H = 2, 8, 32, 4
    hs = D // H

    key = jax.random.PRNGKey(0)
    k1, k2, k3, k4, k5 = jax.random.split(key, 5)
    x = jax.random.normal(k1, (B, S, D), jnp.float32)
    # proj = nn.Linear(D, 3D); ff = nn.Linear(D, D)  (stored as (in, out) for x @ W)
    wp = jax.random.normal(k2, (D, 3 * D), jnp.float32) * (1.0 / math.sqrt(D))
    bp = jax.random.normal(k3, (1, 3 * D), jnp.float32) * 0.01
    wf = jax.random.normal(k4, (D, D), jnp.float32) * (1.0 / math.sqrt(D))
    bf = jax.random.normal(k5, (1, D), jnp.float32) * 0.01

    # Standard RoPE freq_cis: (S, hs/2) complex
    inv_freq = 1.0 / (10000.0 ** (jnp.arange(0, hs, 2, dtype=jnp.float32) / hs))
    t = jnp.arange(S, dtype=jnp.float32)
    ang = jnp.outer(t, inv_freq)
    freq_cis = jnp.exp(1j * ang.astype(jnp.complex64))

    # Causal mask (S, S): 1 = keep, 0 = masked
    mask = jnp.tril(jnp.ones((S, S), jnp.float32))

    ff_o, next_prefix_kv = rope_mha_forward(x, wp, bp, wf, bf, freq_cis, freq_cis, mask, H)
    jax.block_until_ready((ff_o, next_prefix_kv))

    ref_o, ref_kv = ref_forward(x, wp, bp, wf, bf, freq_cis, freq_cis, mask, H)
    assert jnp.allclose(ff_o, ref_o, atol=2e-2, rtol=2e-2), "ff_o mismatch vs reference"
    assert jnp.allclose(next_prefix_kv, ref_kv, atol=1e-2, rtol=1e-2), "kv mismatch vs reference"

    print("KERNEL_OK")
</pallas_src>

<mosaic_0001>
module attributes {stable_mosaic.version = 11 : i64} {
  func.func @kv_proj_kernel(%arg0: i32, %arg1: i32, %arg2: memref<1x8x32xbf16, #tpu.memory_space<vmem>>, %arg3: memref<32x64xbf16, #tpu.memory_space<vmem>>, %arg4: memref<1x64xf32, #tpu.memory_space<vmem>>, %arg5: memref<8x4xf32, #tpu.memory_space<vmem>>, %arg6: memref<8x4xf32, #tpu.memory_space<vmem>>, %arg7: memref<2x1x8x32xf32, #tpu.memory_space<vmem>>, %arg8: memref<1x8x32xbf16, #tpu.memory_space<vmem>>, %arg9: memref<1x8x32xbf16, #tpu.memory_space<vmem>>) attributes {dimension_semantics = [#tpu.dimension_semantics<parallel>, #tpu.dimension_semantics<parallel>], iteration_bounds = array<i64: 2, 1>, scalar_prefetch = 0 : i64, scratch_operands = 0 : i64, tpu.core_type = #tpu.core_type<tc>, window_params = [{transform_indices = @transform_0, window_bounds = array<i64: 1, 8, 32>}, {pipeline_mode = #tpu.pipeline_mode<synchronous>, transform_indices = @transform_1, window_bounds = array<i64: 32, 64>}, {pipeline_mode = #tpu.pipeline_mode<synchronous>, transform_indices = @transform_2, window_bounds = array<i64: 1, 64>}, {transform_indices = @transform_3, window_bounds = array<i64: 8, 4>}, {transform_indices = @transform_4, window_bounds = array<i64: 8, 4>}, {transform_indices = @transform_5, window_bounds = array<i64: 2, 1, 8, 32>}, {transform_indices = @transform_6, window_bounds = array<i64: 1, 8, 32>}, {transform_indices = @transform_7, window_bounds = array<i64: 1, 8, 32>}]} {
    %c0 = arith.constant 0 : index
    %c0_0 = arith.constant 0 : index
    %c0_1 = arith.constant 0 : index
    %0 = vector.load %arg2[%c0, %c0_0, %c0_1] : memref<1x8x32xbf16, #tpu.memory_space<vmem>>, vector<1x8x32xbf16>
    %1 = vector.shape_cast %0 : vector<1x8x32xbf16> to vector<8x32xbf16>
    %c0_2 = arith.constant 0 : index
    %c0_3 = arith.constant 0 : index
    %2 = vector.load %arg3[%c0_2, %c0_3] : memref<32x64xbf16, #tpu.memory_space<vmem>>, vector<32x64xbf16>
    %cst = arith.constant dense<0.000000e+00> : vector<8x64xf32>
    %3 = tpu.matmul %1, %2, %cst {dimension_numbers = #tpu.dot_dimension_numbers<[1], [0], [0], [1], [0, 0, 1, 1], [], []>} : vector<8x32xbf16>, vector<32x64xbf16>, vector<8x64xf32> -> vector<8x64xf32>
    %c0_4 = arith.constant 0 : index
    %c0_5 = arith.constant 0 : index
    %4 = vector.load %arg4[%c0_4, %c0_5] : memref<1x64xf32, #tpu.memory_space<vmem>>, vector<1x64xf32>
    %5 = vector.broadcast %4 : vector<1x64xf32> to vector<8x64xf32>
    %6 = arith.addf %3, %5 : vector<8x64xf32>
    %7 = vector.extract_strided_slice %6 {offsets = [0, 0], sizes = [8, 32], strides = [1, 1]} : vector<8x64xf32> to vector<8x32xf32>
    %8 = vector.extract_strided_slice %6 {offsets = [0, 32], sizes = [8, 32], strides = [1, 1]} : vector<8x64xf32> to vector<8x32xf32>
    %c0_6 = arith.constant 0 : index
    %c0_7 = arith.constant 0 : index
    %c0_8 = arith.constant 0 : index
    %c0_9 = arith.constant 0 : index
    %9 = vector.load %arg7[%c0_6, %c0_7, %c0_8, %c0_9] : memref<2x1x8x32xf32, #tpu.memory_space<vmem>>, vector<1x1x8x32xf32>
    %10 = vector.shape_cast %9 : vector<1x1x8x32xf32> to vector<8x32xf32>
    %11 = vector.shape_cast %7 : vector<8x32xf32> to vector<1x1x8x32xf32>
    tpu.vector_store %arg7[%c0_6, %c0_7, %c0_8, %c0_9], %11 {strides = array<i32>} : memref<2x1x8x32xf32, #tpu.memory_space<vmem>>, vector<1x1x8x32xf32>,
    %c1 = arith.constant 1 : index
    %c0_10 = arith.constant 0 : index
    %c0_11 = arith.constant 0 : index
    %c0_12 = arith.constant 0 : index
    %12 = vector.load %arg7[%c1, %c0_10, %c0_11, %c0_12] : memref<2x1x8x32xf32, #tpu.memory_space<vmem>>, vector<1x1x8x32xf32>
    %13 = vector.shape_cast %12 : vector<1x1x8x32xf32> to vector<8x32xf32>
    %14 = vector.shape_cast %8 : vector<8x32xf32> to vector<1x1x8x32xf32>
    tpu.vector_store %arg7[%c1, %c0_10, %c0_11, %c0_12], %14 {strides = array<i32>} : memref<2x1x8x32xf32, #tpu.memory_space<vmem>>, vector<1x1x8x32xf32>,
    %15 = arith.truncf %8 : vector<8x32xf32> to vector<8x32xbf16>
    %c0_13 = arith.constant 0 : index
    %c0_14 = arith.constant 0 : index
    %c0_15 = arith.constant 0 : index
    %16 = vector.load %arg9[%c0_13, %c0_14, %c0_15] : memref<1x8x32xbf16, #tpu.memory_space<vmem>>, vector<1x8x32xbf16>
    %17 = vector.shape_cast %16 : vector<1x8x32xbf16> to vector<8x32xbf16>
    %18 = vector.shape_cast %15 : vector<8x32xbf16> to vector<1x8x32xbf16>
    tpu.vector_store %arg9[%c0_13, %c0_14, %c0_15], %18 {strides = array<i32>} : memref<1x8x32xbf16, #tpu.memory_space<vmem>>, vector<1x8x32xbf16>,
    %c0_16 = arith.constant 0 : index
    %c0_17 = arith.constant 0 : index
    %19 = vector.load %arg5[%c0_16, %c0_17] : memref<8x4xf32, #tpu.memory_space<vmem>>, vector<8x4xf32>
    %c0_18 = arith.constant 0 : index
    %c0_19 = arith.constant 0 : index
    %20 = vector.load %arg6[%c0_18, %c0_19] : memref<8x4xf32, #tpu.memory_space<vmem>>, vector<8x4xf32>
    %21 = vector.extract_strided_slice %7 {offsets = [0, 0], sizes = [8, 4], strides = [1, 1]} : vector<8x32xf32> to vector<8x4xf32>
    %22 = vector.extract_strided_slice %7 {offsets = [0, 4], sizes = [8, 4], strides = [1, 1]} : vector<8x32xf32> to vector<8x4xf32>
    %23 = arith.mulf %19, %21 : vector<8x4xf32>
    %24 = arith.mulf %20, %22 : vector<8x4xf32>
    %25 = arith.subf %23, %24 : vector<8x4xf32>
    %26 = arith.truncf %25 : vector<8x4xf32> to vector<8x4xbf16>
    %c0_20 = arith.constant 0 : index
    %c0_21 = arith.constant 0 : index
    %c0_22 = arith.constant 0 : index
    %27 = vector.load %arg8[%c0_20, %c0_21, %c0_22] : memref<1x8x32xbf16, #tpu.memory_space<vmem>>, vector<1x8x4xbf16>
    %28 = vector.shape_cast %27 : vector<1x8x4xbf16> to vector<8x4xbf16>
    %29 = vector.shape_cast %26 : vector<8x4xbf16> to vector<1x8x4xbf16>
    tpu.vector_store %arg8[%c0_20, %c0_21, %c0_22], %29 {strides = array<i32>} : memref<1x8x32xbf16, #tpu.memory_space<vmem>>, vector<1x8x4xbf16>,
    %30 = arith.mulf %19, %22 : vector<8x4xf32>
    %31 = arith.mulf %20, %21 : vector<8x4xf32>
    %32 = arith.addf %30, %31 : vector<8x4xf32>
    %33 = arith.truncf %32 : vector<8x4xf32> to vector<8x4xbf16>
    %c0_23 = arith.constant 0 : index
    %c0_24 = arith.constant 0 : index
    %c4 = arith.constant 4 : index
    %34 = vector.load %arg8[%c0_23, %c0_24, %c4] : memref<1x8x32xbf16, #tpu.memory_space<vmem>>, vector<1x8x4xbf16>
    %35 = vector.shape_cast %34 : vector<1x8x4xbf16> to vector<8x4xbf16>
    %36 = vector.shape_cast %33 : vector<8x4xbf16> to vector<1x8x4xbf16>
    tpu.vector_store %arg8[%c0_23, %c0_24, %c4], %36 {strides = array<i32>} : memref<1x8x32xbf16, #tpu.memory_space<vmem>>, vector<1x8x4xbf16>,
    %37 = vector.extract_strided_slice %7 {offsets = [0, 8], sizes = [8, 4], strides = [1, 1]} : vector<8x32xf32> to vector<8x4xf32>
    %38 = vector.extract_strided_slice %7 {offsets = [0, 12], sizes = [8, 4], strides = [1, 1]} : vector<8x32xf32> to vector<8x4xf32>
    %39 = arith.mulf %19, %37 : vector<8x4xf32>
    %40 = arith.mulf %20, %38 : vector<8x4xf32>
    %41 = arith.subf %39, %40 : vector<8x4xf32>
    %42 = arith.truncf %41 : vector<8x4xf32> to vector<8x4xbf16>
    %c0_25 = arith.constant 0 : index
    %c0_26 = arith.constant 0 : index
    %c8 = arith.constant 8 : index
    %43 = vector.load %arg8[%c0_25, %c0_26, %c8] : memref<1x8x32xbf16, #tpu.memory_space<vmem>>, vector<1x8x4xbf16>
    %44 = vector.shape_cast %43 : vector<1x8x4xbf16> to vector<8x4xbf16>
    %45 = vector.shape_cast %42 : vector<8x4xbf16> to vector<1x8x4xbf16>
    tpu.vector_store %arg8[%c0_25, %c0_26, %c8], %45 {strides = array<i32>} : memref<1x8x32xbf16, #tpu.memory_space<vmem>>, vector<1x8x4xbf16>,
    %46 = arith.mulf %19, %38 : vector<8x4xf32>
    %47 = arith.mulf %20, %37 : vector<8x4xf32>
    %48 = arith.addf %46, %47 : vector<8x4xf32>
    %49 = arith.truncf %48 : vector<8x4xf32> to vector<8x4xbf16>
    %c0_27 = arith.constant 0 : index
    %c0_28 = arith.constant 0 : index
    %c12 = arith.constant 12 : index
    %50 = vector.load %arg8[%c0_27, %c0_28, %c12] : memref<1x8x32xbf16, #tpu.memory_space<vmem>>, vector<1x8x4xbf16>
    %51 = vector.shape_cast %50 : vector<1x8x4xbf16> to vector<8x4xbf16>
    %52 = vector.shape_cast %49 : vector<8x4xbf16> to vector<1x8x4xbf16>
    tpu.vector_store %arg8[%c0_27, %c0_28, %c12], %52 {strides = array<i32>} : memref<1x8x32xbf16, #tpu.memory_space<vmem>>, vector<1x8x4xbf16>,
    %53 = vector.extract_strided_slice %7 {offsets = [0, 16], sizes = [8, 4], strides = [1, 1]} : vector<8x32xf32> to vector<8x4xf32>
    %54 = vector.extract_strided_slice %7 {offsets = [0, 20], sizes = [8, 4], strides = [1, 1]} : vector<8x32xf32> to vector<8x4xf32>
    %55 = arith.mulf %19, %53 : vector<8x4xf32>
    %56 = arith.mulf %20, %54 : vector<8x4xf32>
    %57 = arith.subf %55, %56 : vector<8x4xf32>
    %58 = arith.truncf %57 : vector<8x4xf32> to vector<8x4xbf16>
    %c0_29 = arith.constant 0 : index
    %c0_30 = arith.constant 0 : index
    %c16 = arith.constant 16 : index
    %59 = vector.load %arg8[%c0_29, %c0_30, %c16] : memref<1x8x32xbf16, #tpu.memory_space<vmem>>, vector<1x8x4xbf16>
    %60 = vector.shape_cast %59 : vector<1x8x4xbf16> to vector<8x4xbf16>
    %61 = vector.shape_cast %58 : vector<8x4xbf16> to vector<1x8x4xbf16>
    tpu.vector_store %arg8[%c0_29, %c0_30, %c16], %61 {strides = array<i32>} : memref<1x8x32xbf16, #tpu.memory_space<vmem>>, vector<1x8x4xbf16>,
    %62 = arith.mulf %19, %54 : vector<8x4xf32>
    %63 = arith.mulf %20, %53 : vector<8x4xf32>
    %64 = arith.addf %62, %63 : vector<8x4xf32>
    %65 = arith.truncf %64 : vector<8x4xf32> to vector<8x4xbf16>
    %c0_31 = arith.constant 0 : index
    %c0_32 = arith.constant 0 : index
    %c20 = arith.constant 20 : index
    %66 = vector.load %arg8[%c0_31, %c0_32, %c20] : memref<1x8x32xbf16, #tpu.memory_space<vmem>>, vector<1x8x4xbf16>
    %67 = vector.shape_cast %66 : vector<1x8x4xbf16> to vector<8x4xbf16>
    %68 = vector.shape_cast %65 : vector<8x4xbf16> to vector<1x8x4xbf16>
    tpu.vector_store %arg8[%c0_31, %c0_32, %c20], %68 {strides = array<i32>} : memref<1x8x32xbf16, #tpu.memory_space<vmem>>, vector<1x8x4xbf16>,
    %69 = vector.extract_strided_slice %7 {offsets = [0, 24], sizes = [8, 4], strides = [1, 1]} : vector<8x32xf32> to vector<8x4xf32>
    %70 = vector.extract_strided_slice %7 {offsets = [0, 28], sizes = [8, 4], strides = [1, 1]} : vector<8x32xf32> to vector<8x4xf32>
    %71 = arith.mulf %19, %69 : vector<8x4xf32>
    %72 = arith.mulf %20, %70 : vector<8x4xf32>
    %73 = arith.subf %71, %72 : vector<8x4xf32>
    %74 = arith.truncf %73 : vector<8x4xf32> to vector<8x4xbf16>
    %c0_33 = arith.constant 0 : index
    %c0_34 = arith.constant 0 : index
    %c24 = arith.constant 24 : index
    %75 = vector.load %arg8[%c0_33, %c0_34, %c24] : memref<1x8x32xbf16, #tpu.memory_space<vmem>>, vector<1x8x4xbf16>
    %76 = vector.shape_cast %75 : vector<1x8x4xbf16> to vector<8x4xbf16>
    %77 = vector.shape_cast %74 : vector<8x4xbf16> to vector<1x8x4xbf16>
    tpu.vector_store %arg8[%c0_33, %c0_34, %c24], %77 {strides = array<i32>} : memref<1x8x32xbf16, #tpu.memory_space<vmem>>, vector<1x8x4xbf16>,
    %78 = arith.mulf %19, %70 : vector<8x4xf32>
    %79 = arith.mulf %20, %69 : vector<8x4xf32>
    %80 = arith.addf %78, %79 : vector<8x4xf32>
    %81 = arith.truncf %80 : vector<8x4xf32> to vector<8x4xbf16>
    %c0_35 = arith.constant 0 : index
    %c0_36 = arith.constant 0 : index
    %c28 = arith.constant 28 : index
    %82 = vector.load %arg8[%c0_35, %c0_36, %c28] : memref<1x8x32xbf16, #tpu.memory_space<vmem>>, vector<1x8x4xbf16>
    %83 = vector.shape_cast %82 : vector<1x8x4xbf16> to vector<8x4xbf16>
    %84 = vector.shape_cast %81 : vector<8x4xbf16> to vector<1x8x4xbf16>
    tpu.vector_store %arg8[%c0_35, %c0_36, %c28], %84 {strides = array<i32>} : memref<1x8x32xbf16, #tpu.memory_space<vmem>>, vector<1x8x4xbf16>,
    return
  }
  func.func @transform_0(%arg0: i32, %arg1: i32) -> (i32, i32, i32) {
    %c0_i32 = arith.constant 0 : i32
    %c0_i32_0 = arith.constant 0 : i32
    return %arg0, %arg1, %c0_i32 : i32, i32, i32
  }
  func.func @transform_1(%arg0: i32, %arg1: i32) -> (i32, i32) {
    %c0_i32 = arith.constant 0 : i32
    %c0_i32_0 = arith.constant 0 : i32
    %c0_i32_1 = arith.constant 0 : i32
    return %c0_i32, %c0_i32_0 : i32, i32
  }
  func.func @transform_2(%arg0: i32, %arg1: i32) -> (i32, i32) {
    %c0_i32 = arith.constant 0 : i32
    %c0_i32_0 = arith.constant 0 : i32
    %c0_i32_1 = arith.constant 0 : i32
    return %c0_i32, %c0_i32_0 : i32, i32
  }
  func.func @transform_3(%arg0: i32, %arg1: i32) -> (i32, i32) {
    %c0_i32 = arith.constant 0 : i32
    %c0_i32_0 = arith.constant 0 : i32
    return %arg1, %c0_i32 : i32, i32
  }
  func.func @transform_4(%arg0: i32, %arg1: i32) -> (i32, i32) {
    %c0_i32 = arith.constant 0 : i32
    %c0_i32_0 = arith.constant 0 : i32
    return %arg1, %c0_i32 : i32, i32
  }
  func.func @transform_5(%arg0: i32, %arg1: i32) -> (i32, i32, i32, i32) {
    %c0_i32 = arith.constant 0 : i32
    %c0_i32_0 = arith.constant 0 : i32
    %c0_i32_1 = arith.constant 0 : i32
    return %c0_i32, %arg0, %arg1, %c0_i32_0 : i32, i32, i32, i32
  }
  func.func @transform_6(%arg0: i32, %arg1: i32) -> (i32, i32, i32) {
    %c0_i32 = arith.constant 0 : i32
    %c0_i32_0 = arith.constant 0 : i32
    return %arg0, %arg1, %c0_i32 : i32, i32, i32
  }
  func.func @transform_7(%arg0: i32, %arg1: i32) -> (i32, i32, i32) {
    %c0_i32 = arith.constant 0 : i32
    %c0_i32_0 = arith.constant 0 : i32
    return %arg0, %arg1, %c0_i32 : i32, i32, i32
  }
}

module attributes {stable_mosaic.version = 11 : i64} {
  func.func @kv_proj_kernel(%arg0: i32, %arg1: i32, %arg2: memref<1x8x32xbf16, #tpu.memory_space<vmem>>, %arg3: memref<32x64xbf16, #tpu.memory_space<vmem>>, %arg4: memref<1x64xf32, #tpu.memory_space<vmem>>, %arg5: memref<8x4xf32, #tpu.memory_space<vmem>>, %arg6: memref<8x4xf32, #tpu.memory_space<vmem>>, %arg7: memref<2x1x8x32xf32, #tpu.memory_space<vmem>>, %arg8: memref<1x8x32xbf16, #tpu.memory_space<vmem>>, %arg9: memref<1x8x32xbf16, #tpu.memory_space<vmem>>) attributes {dimension_semantics = [#tpu.dimension_semantics<parallel>, #tpu.dimension_semantics<parallel>], iteration_bounds = array<i64: 2, 1>, scalar_prefetch = 0 : i64, scratch_operands = 0 : i64, tpu.core_type = #tpu.core_type<tc>, window_params = [{transform_indices = @transform_0, window_bounds = array<i64: 1, 8, 32>}, {pipeline_mode = #tpu.pipeline_mode<synchronous>, transform_indices = @transform_1, window_bounds = array<i64: 32, 64>}, {pipeline_mode = #tpu.pipeline_mode<synchronous>, transform_indices = @transform_2, window_bounds = array<i64: 1, 64>}, {transform_indices = @transform_3, window_bounds = array<i64: 8, 4>}, {transform_indices = @transform_4, window_bounds = array<i64: 8, 4>}, {transform_indices = @transform_5, window_bounds = array<i64: 2, 1, 8, 32>}, {transform_indices = @transform_6, window_bounds = array<i64: 1, 8, 32>}, {transform_indices = @transform_7, window_bounds = array<i64: 1, 8, 32>}]} {
    %c0 = arith.constant 0 : index
    %c0_0 = arith.constant 0 : index
    %c0_1 = arith.constant 0 : index
    %0 = vector.load %arg2[%c0, %c0_0, %c0_1] : memref<1x8x32xbf16, #tpu.memory_space<vmem>>, vector<1x8x32xbf16>
    %1 = vector.shape_cast %0 : vector<1x8x32xbf16> to vector<8x32xbf16>
    %c0_2 = arith.constant 0 : index
    %c0_3 = arith.constant 0 : index
    %2 = vector.load %arg3[%c0_2, %c0_3] : memref<32x64xbf16, #tpu.memory_space<vmem>>, vector<32x64xbf16>
    %cst = arith.constant dense<0.000000e+00> : vector<8x64xf32>
    %3 = tpu.matmul %1, %2, %cst {dimension_numbers = #tpu.dot_dimension_numbers<[1], [0], [0], [1], [0, 0, 1, 1], [], []>} : vector<8x32xbf16>, vector<32x64xbf16>, vector<8x64xf32> -> vector<8x64xf32>
    %c0_4 = arith.constant 0 : index
    %c0_5 = arith.constant 0 : index
    %4 = vector.load %arg4[%c0_4, %c0_5] : memref<1x64xf32, #tpu.memory_space<vmem>>, vector<1x64xf32>
    %5 = vector.broadcast %4 : vector<1x64xf32> to vector<8x64xf32>
    %6 = arith.addf %3, %5 : vector<8x64xf32>
    %7 = vector.extract_strided_slice %6 {offsets = [0, 0], sizes = [8, 32], strides = [1, 1]} : vector<8x64xf32> to vector<8x32xf32>
    %8 = vector.extract_strided_slice %6 {offsets = [0, 32], sizes = [8, 32], strides = [1, 1]} : vector<8x64xf32> to vector<8x32xf32>
    %c0_6 = arith.constant 0 : index
    %c0_7 = arith.constant 0 : index
    %c0_8 = arith.constant 0 : index
    %c0_9 = arith.constant 0 : index
    %9 = vector.load %arg7[%c0_6, %c0_7, %c0_8, %c0_9] : memref<2x1x8x32xf32, #tpu.memory_space<vmem>>, vector<1x1x8x32xf32>
    %10 = vector.shape_cast %9 : vector<1x1x8x32xf32> to vector<8x32xf32>
    %11 = vector.shape_cast %7 : vector<8x32xf32> to vector<1x1x8x32xf32>
    tpu.vector_store %arg7[%c0_6, %c0_7, %c0_8, %c0_9], %11 {strides = array<i32>} : memref<2x1x8x32xf32, #tpu.memory_space<vmem>>, vector<1x1x8x32xf32>,
    %c1 = arith.constant 1 : index
    %c0_10 = arith.constant 0 : index
    %c0_11 = arith.constant 0 : index
    %c0_12 = arith.constant 0 : index
    %12 = vector.load %arg7[%c1, %c0_10, %c0_11, %c0_12] : memref<2x1x8x32xf32, #tpu.memory_space<vmem>>, vector<1x1x8x32xf32>
    %13 = vector.shape_cast %12 : vector<1x1x8x32xf32> to vector<8x32xf32>
    %14 = vector.shape_cast %8 : vector<8x32xf32> to vector<1x1x8x32xf32>
    tpu.vector_store %arg7[%c1, %c0_10, %c0_11, %c0_12], %14 {strides = array<i32>} : memref<2x1x8x32xf32, #tpu.memory_space<vmem>>, vector<1x1x8x32xf32>,
    %15 = arith.truncf %8 : vector<8x32xf32> to vector<8x32xbf16>
    %c0_13 = arith.constant 0 : index
    %c0_14 = arith.constant 0 : index
    %c0_15 = arith.constant 0 : index
    %16 = vector.load %arg9[%c0_13, %c0_14, %c0_15] : memref<1x8x32xbf16, #tpu.memory_space<vmem>>, vector<1x8x32xbf16>
    %17 = vector.shape_cast %16 : vector<1x8x32xbf16> to vector<8x32xbf16>
    %18 = vector.shape_cast %15 : vector<8x32xbf16> to vector<1x8x32xbf16>
    tpu.vector_store %arg9[%c0_13, %c0_14, %c0_15], %18 {strides = array<i32>} : memref<1x8x32xbf16, #tpu.memory_space<vmem>>, vector<1x8x32xbf16>,
    %c0_16 = arith.constant 0 : index
    %c0_17 = arith.constant 0 : index
    %19 = vector.load %arg5[%c0_16, %c0_17] : memref<8x4xf32, #tpu.memory_space<vmem>>, vector<8x4xf32>
    %c0_18 = arith.constant 0 : index
    %c0_19 = arith.constant 0 : index
    %20 = vector.load %arg6[%c0_18, %c0_19] : memref<8x4xf32, #tpu.memory_space<vmem>>, vector<8x4xf32>
    %21 = vector.extract_strided_slice %7 {offsets = [0, 0], sizes = [8, 4], strides = [1, 1]} : vector<8x32xf32> to vector<8x4xf32>
    %22 = vector.extract_strided_slice %7 {offsets = [0, 4], sizes = [8, 4], strides = [1, 1]} : vector<8x32xf32> to vector<8x4xf32>
    %23 = arith.mulf %19, %21 : vector<8x4xf32>
    %24 = arith.mulf %20, %22 : vector<8x4xf32>
    %25 = arith.subf %23, %24 : vector<8x4xf32>
    %26 = arith.truncf %25 : vector<8x4xf32> to vector<8x4xbf16>
    %c0_20 = arith.constant 0 : index
    %c0_21 = arith.constant 0 : index
    %c0_22 = arith.constant 0 : index
    %27 = vector.load %arg8[%c0_20, %c0_21, %c0_22] : memref<1x8x32xbf16, #tpu.memory_space<vmem>>, vector<1x8x4xbf16>
    %28 = vector.shape_cast %27 : vector<1x8x4xbf16> to vector<8x4xbf16>
    %29 = vector.shape_cast %26 : vector<8x4xbf16> to vector<1x8x4xbf16>
    tpu.vector_store %arg8[%c0_20, %c0_21, %c0_22], %29 {strides = array<i32>} : memref<1x8x32xbf16, #tpu.memory_space<vmem>>, vector<1x8x4xbf16>,
    %30 = arith.mulf %19, %22 : vector<8x4xf32>
    %31 = arith.mulf %20, %21 : vector<8x4xf32>
    %32 = arith.addf %30, %31 : vector<8x4xf32>
    %33 = arith.truncf %32 : vector<8x4xf32> to vector<8x4xbf16>
    %c0_23 = arith.constant 0 : index
    %c0_24 = arith.constant 0 : index
    %c4 = arith.constant 4 : index
    %34 = vector.load %arg8[%c0_23, %c0_24, %c4] : memref<1x8x32xbf16, #tpu.memory_space<vmem>>, vector<1x8x4xbf16>
    %35 = vector.shape_cast %34 : vector<1x8x4xbf16> to vector<8x4xbf16>
    %36 = vector.shape_cast %33 : vector<8x4xbf16> to vector<1x8x4xbf16>
    tpu.vector_store %arg8[%c0_23, %c0_24, %c4], %36 {strides = array<i32>} : memref<1x8x32xbf16, #tpu.memory_space<vmem>>, vector<1x8x4xbf16>,
    %37 = vector.extract_strided_slice %7 {offsets = [0, 8], sizes = [8, 4], strides = [1, 1]} : vector<8x32xf32> to vector<8x4xf32>
    %38 = vector.extract_strided_slice %7 {offsets = [0, 12], sizes = [8, 4], strides = [1, 1]} : vector<8x32xf32> to vector<8x4xf32>
    %39 = arith.mulf %19, %37 : vector<8x4xf32>
    %40 = arith.mulf %20, %38 : vector<8x4xf32>
    %41 = arith.subf %39, %40 : vector<8x4xf32>
    %42 = arith.truncf %41 : vector<8x4xf32> to vector<8x4xbf16>
    %c0_25 = arith.constant 0 : index
    %c0_26 = arith.constant 0 : index
    %c8 = arith.constant 8 : index
    %43 = vector.load %arg8[%c0_25, %c0_26, %c8] : memref<1x8x32xbf16, #tpu.memory_space<vmem>>, vector<1x8x4xbf16>
    %44 = vector.shape_cast %43 : vector<1x8x4xbf16> to vector<8x4xbf16>
    %45 = vector.shape_cast %42 : vector<8x4xbf16> to vector<1x8x4xbf16>
    tpu.vector_store %arg8[%c0_25, %c0_26, %c8], %45 {strides = array<i32>} : memref<1x8x32xbf16, #tpu.memory_space<vmem>>, vector<1x8x4xbf16>,
    %46 = arith.mulf %19, %38 : vector<8x4xf32>
    %47 = arith.mulf %20, %37 : vector<8x4xf32>
    %48 = arith.addf %46, %47 : vector<8x4xf32>
    %49 = arith.truncf %48 : vector<8x4xf32> to vector<8x4xbf16>
    %c0_27 = arith.constant 0 : index
    %c0_28 = arith.constant 0 : index
    %c12 = arith.constant 12 : index
    %50 = vector.load %arg8[%c0_27, %c0_28, %c12] : memref<1x8x32xbf16, #tpu.memory_space<vmem>>, vector<1x8x4xbf16>
    %51 = vector.shape_cast %50 : vector<1x8x4xbf16> to vector<8x4xbf16>
    %52 = vector.shape_cast %49 : vector<8x4xbf16> to vector<1x8x4xbf16>
    tpu.vector_store %arg8[%c0_27, %c0_28, %c12], %52 {strides = array<i32>} : memref<1x8x32xbf16, #tpu.memory_space<vmem>>, vector<1x8x4xbf16>,
    %53 = vector.extract_strided_slice %7 {offsets = [0, 16], sizes = [8, 4], strides = [1, 1]} : vector<8x32xf32> to vector<8x4xf32>
    %54 = vector.extract_strided_slice %7 {offsets = [0, 20], sizes = [8, 4], strides = [1, 1]} : vector<8x32xf32> to vector<8x4xf32>
    %55 = arith.mulf %19, %53 : vector<8x4xf32>
    %56 = arith.mulf %20, %54 : vector<8x4xf32>
    %57 = arith.subf %55, %56 : vector<8x4xf32>
    %58 = arith.truncf %57 : vector<8x4xf32> to vector<8x4xbf16>
    %c0_29 = arith.constant 0 : index
    %c0_30 = arith.constant 0 : index
    %c16 = arith.constant 16 : index
    %59 = vector.load %arg8[%c0_29, %c0_30, %c16] : memref<1x8x32xbf16, #tpu.memory_space<vmem>>, vector<1x8x4xbf16>
    %60 = vector.shape_cast %59 : vector<1x8x4xbf16> to vector<8x4xbf16>
    %61 = vector.shape_cast %58 : vector<8x4xbf16> to vector<1x8x4xbf16>
    tpu.vector_store %arg8[%c0_29, %c0_30, %c16], %61 {strides = array<i32>} : memref<1x8x32xbf16, #tpu.memory_space<vmem>>, vector<1x8x4xbf16>,
    %62 = arith.mulf %19, %54 : vector<8x4xf32>
    %63 = arith.mulf %20, %53 : vector<8x4xf32>
    %64 = arith.addf %62, %63 : vector<8x4xf32>
    %65 = arith.truncf %64 : vector<8x4xf32> to vector<8x4xbf16>
    %c0_31 = arith.constant 0 : index
    %c0_32 = arith.constant 0 : index
    %c20 = arith.constant 20 : index
    %66 = vector.load %arg8[%c0_31, %c0_32, %c20] : memref<1x8x32xbf16, #tpu.memory_space<vmem>>, vector<1x8x4xbf16>
    %67 = vector.shape_cast %66 : vector<1x8x4xbf16> to vector<8x4xbf16>
    %68 = vector.shape_cast %65 : vector<8x4xbf16> to vector<1x8x4xbf16>
    tpu.vector_store %arg8[%c0_31, %c0_32, %c20], %68 {strides = array<i32>} : memref<1x8x32xbf16, #tpu.memory_space<vmem>>, vector<1x8x4xbf16>,
    %69 = vector.extract_strided_slice %7 {offsets = [0, 24], sizes = [8, 4], strides = [1, 1]} : vector<8x32xf32> to vector<8x4xf32>
    %70 = vector.extract_strided_slice %7 {offsets = [0, 28], sizes = [8, 4], strides = [1, 1]} : vector<8x32xf32> to vector<8x4xf32>
    %71 = arith.mulf %19, %69 : vector<8x4xf32>
    %72 = arith.mulf %20, %70 : vector<8x4xf32>
    %73 = arith.subf %71, %72 : vector<8x4xf32>
    %74 = arith.truncf %73 : vector<8x4xf32> to vector<8x4xbf16>
    %c0_33 = arith.constant 0 : index
    %c0_34 = arith.constant 0 : index
    %c24 = arith.constant 24 : index
    %75 = vector.load %arg8[%c0_33, %c0_34, %c24] : memref<1x8x32xbf16, #tpu.memory_space<vmem>>, vector<1x8x4xbf16>
    %76 = vector.shape_cast %75 : vector<1x8x4xbf16> to vector<8x4xbf16>
    %77 = vector.shape_cast %74 : vector<8x4xbf16> to vector<1x8x4xbf16>
    tpu.vector_store %arg8[%c0_33, %c0_34, %c24], %77 {strides = array<i32>} : memref<1x8x32xbf16, #tpu.memory_space<vmem>>, vector<1x8x4xbf16>,
    %78 = arith.mulf %19, %70 : vector<8x4xf32>
    %79 = arith.mulf %20, %69 : vector<8x4xf32>
    %80 = arith.addf %78, %79 : vector<8x4xf32>
    %81 = arith.truncf %80 : vector<8x4xf32> to vector<8x4xbf16>
    %c0_35 = arith.constant 0 : index
    %c0_36 = arith.constant 0 : index
    %c28 = arith.constant 28 : index
    %82 = vector.load %arg8[%c0_35, %c0_36, %c28] : memref<1x8x32xbf16, #tpu.memory_space<vmem>>, vector<1x8x4xbf16>
    %83 = vector.shape_cast %82 : vector<1x8x4xbf16> to vector<8x4xbf16>
    %84 = vector.shape_cast %81 : vector<8x4xbf16> to vector<1x8x4xbf16>
    tpu.vector_store %arg8[%c0_35, %c0_36, %c28], %84 {strides = array<i32>} : memref<1x8x32xbf16, #tpu.memory_space<vmem>>, vector<1x8x4xbf16>,
    return
  }
  func.func @transform_0(%arg0: i32, %arg1: i32) -> (i32, i32, i32) {
    %c0_i32 = arith.constant 0 : i32
    %c0_i32_0 = arith.constant 0 : i32
    return %arg0, %arg1, %c0_i32 : i32, i32, i32
  }
  func.func @transform_1(%arg0: i32, %arg1: i32) -> (i32, i32) {
    %c0_i32 = arith.constant 0 : i32
    %c0_i32_0 = arith.constant 0 : i32
    %c0_i32_1 = arith.constant 0 : i32
    return %c0_i32, %c0_i32_0 : i32, i32
  }
  func.func @transform_2(%arg0: i32, %arg1: i32) -> (i32, i32) {
    %c0_i32 = arith.constant 0 : i32
    %c0_i32_0 = arith.constant 0 : i32
    %c0_i32_1 = arith.constant 0 : i32
    return %c0_i32, %c0_i32_0 : i32, i32
  }
  func.func @transform_3(%arg0: i32, %arg1: i32) -> (i32, i32) {
    %c0_i32 = arith.constant 0 : i32
    %c0_i32_0 = arith.constant 0 : i32
    return %arg1, %c0_i32 : i32, i32
  }
  func.func @transform_4(%arg0: i32, %arg1: i32) -> (i32, i32) {
    %c0_i32 = arith.constant 0 : i32
    %c0_i32_0 = arith.constant 0 : i32
    return %arg1, %c0_i32 : i32, i32
  }
  func.func @transform_5(%arg0: i32, %arg1: i32) -> (i32, i32, i32, i32) {
    %c0_i32 = arith.constant 0 : i32
    %c0_i32_0 = arith.constant 0 : i32
    %c0_i32_1 = arith.constant 0 : i32
    return %c0_i32, %arg0, %arg1, %c0_i32_0 : i32, i32, i32, i32
  }
  func.func @transform_6(%arg0: i32, %arg1: i32) -> (i32, i32, i32) {
    %c0_i32 = arith.constant 0 : i32
    %c0_i32_0 = arith.constant 0 : i32
    return %arg0, %arg1, %c0_i32 : i32, i32, i32
  }
  func.func @transform_7(%arg0: i32, %arg1: i32) -> (i32, i32, i32) {
    %c0_i32 = arith.constant 0 : i32
    %c0_i32_0 = arith.constant 0 : i32
    return %arg0, %arg1, %c0_i32 : i32, i32, i32
  }
}

</mosaic_0001>

<llo_original>
// kernel: tpu_custom_call.1
$region0: #{tpu_custom_call.1}
  #allocation0 [shape = 'u32[]', space=smem, size = 0x4, offset = 0x4, fixed_abs, tag = 'smem constant byte address 0x4 - core index']
  #allocation1 [shape = 'u32[144,128]{1,0:T(1,128)}', space=vmem, size = 0x12000, scoped, tag = 'internal scratch']
  %s0 = inlined_call_operand.vmem [shape: bf16[2,8,32], index: 0, kind: input, shape index: {}]
  %s1 = inlined_call_operand.vmem [shape: bf16[32,64], index: 1, kind: input, shape index: {}]
  %s2 = inlined_call_operand.vmem [shape: f32[1,64], index: 2, kind: input, shape index: {}]
  %s3 = inlined_call_operand.vmem [shape: f32[8,4], index: 3, kind: input, shape index: {}]
  %s4 = inlined_call_operand.vmem [shape: f32[8,4], index: 4, kind: input, shape index: {}]
  %s5 = inlined_call_operand.hbm [shape: f32[2,2,8,32], index: 5, kind: output, shape index: {0}]
  %s6 = inlined_call_operand.hbm [shape: bf16[2,8,32], index: 6, kind: output, shape index: {1}]
  %s7 = inlined_call_operand.hbm [shape: bf16[2,8,32], index: 7, kind: output, shape index: {2}]
  %8 = xla_tuple %s5, %s6, %s7
  %s9 = sld [smem:[#allocation0]]
  $region69: #{tpu_custom_call.1} parent=0
    _
  %s11 = ssub.s32 1, %s9
  %s12 = scalar_select 0, %s11, %s9
  $region1: #{tpu_custom_call.1} parent=0
    #allocation2 [shape = 'u8[16384]{0}', space=vmem, size = 0x4000, scoped, tag = 'output window, operand 0']
    #allocation3 [shape = 's32[2]{0}', space=sflag, size = 0x8, scoped, tag = 'scoped memory for tpu_custom_call.1']
    #allocation4 [shape = 'u8[4096]{0}', space=vmem, size = 0x1000, scoped, tag = 'output window, operand 1']
    #allocation5 [shape = 's32[2]{0}', space=sflag, size = 0x8, scoped, tag = 'scoped memory for tpu_custom_call.1']
    #allocation6 [shape = 'u8[4096]{0}', space=vmem, size = 0x1000, scoped, tag = 'output window, operand 2']
    %13 = vsyncpa [#allocation3], 0
    %s14 = scalar_lea.sflag [#allocation3], 1
    %15 = vsyncpa %s14, 0
    %16 = vsyncpa [#allocation5], 0
    %s17 = scalar_lea.sflag [#allocation5], 1
    %18 = vsyncpa %s17, 0
    loop: start=0, step=1, limit=4
    $region2: #{tpu_custom_call.1} parent=1 // loop_pre_header
      _
    $region3: #{tpu_custom_call.1} parent=1 // loop_header
      %s20 = sphi 0, %s24
      %p21 = scmp.ge.s32.totalorder %s20, 4
      %s27 = sphi 0, %s39
      %s28 = sphi 0, %s35
      %s29 = sphi 0, %s27
      %s30 = sphi 0, %s28
      %s31 = sphi 0, %s29
      %s32 = sphi 0, %s30
      %s44 = sphi 0, %s46
      %s47 = sphi 0, %s44
      %s48 = sphi 0, %s47
      %s64 = sphi 0, %s48
      %s68 = sphi 0, %s68
      %s70 = sphi 0, %s68
      %s71 = sphi 0, %s70
      %s85 = sphi 0, %s71
      %s89 = sphi 0, %s89
      %s91 = sphi 0, %s89
      %s92 = sphi 0, %s91
      %s106 = sphi 0, %s92
      %s112 = sphi 0, %s114
      %s115 = sphi 0, %s112
      %s116 = sphi 0, %s115
      %s132 = sphi 0, %s116
      %s138 = sphi 0, %s140
      %s141 = sphi 0, %s138
      %s142 = sphi 0, %s141
      %s158 = sphi 0, %s142
      %s166 = sphi 0, %s168
      %s169 = sphi 0, %s166
      %s170 = sphi 0, %s169
      %s186 = sphi 0, %s170
      %s194 = sphi 0, %s196
      %s197 = sphi 0, %s194
      %s198 = sphi 0, %s197
      %s214 = sphi 0, %s198
      %s222 = sphi 0, %s224
      %s225 = sphi 0, %s222
      %s226 = sphi 0, %s225
      %s242 = sphi 0, %s226
    $region4: #{tpu_custom_call.1} parent=1 // loop_header_branch
      %23 = sbr.rel (%p21) target = $region8
    $region5: #{tpu_custom_call.1} parent=1 // loop_body
      %s25 = ssub.s32 %s20, 1
      %s26 = ssub.s32 %s20, 2
      %s33 = sadd.s32 1, %s28
      %p34 = scmp.ge.s32.totalorder %s33, 1
      %s35 = scalar_select %p34, 0, %s33
      %s36 = sadd.s32 1, %s27
      %s37 = scalar_select %p34, %s36, %s27
      %p38 = scmp.ge.s32.totalorder %s37, 2
      %s39 = scalar_select %p38, 0, %s37
      %s40 = ssub.s32 %s27, %s39
      %s41 = ssub.s32 %s28, %s35
      %s42 = sor.u32 %s40, %s41
      %p43 = scmp.eq.s32.totalorder %s42, 0
      %s45 = sadd.s32 %s44, 1
      %s46 = scalar_select %p43, %s44, %s45
      %p49 = pneg %p43
      %p50 = scmp.eq.s32.totalorder %s20, 1
      %p51 = por %p49, %p50
      %p52 = scmp.ne.s32.totalorder %s44, %s47
      %p53 = scmp.eq.s32.totalorder %s20, 0
      %p54 = por %p52, %p53
      %p55 = scmp.ne.s32.totalorder %s44, %s47
      %p56 = scmp.eq.s32.totalorder %s25, 1
      %p57 = por %p55, %p56
      %p58 = scmp.ne.s32.totalorder %s47, %s48
      %p59 = scmp.eq.s32.totalorder %s25, 0
      %p60 = por %p58, %p59
      %p61 = scmp.ne.s32.totalorder %s47, %s48
      %p62 = scmp.eq.s32.totalorder %s26, 1
      %p63 = por %p61, %p62
      %p65 = scmp.ne.s32.totalorder %s48, %s64
      %p66 = scmp.eq.s32.totalorder %s26, 0
      %p67 = por %p65, %p66
      %s69 = sadd.s32 %s68, 1
      %p72 = scmp.eq.s32.totalorder %s20, 1
      %p73 = scmp.ne.s32.totalorder %s68, %s70
      %p74 = scmp.eq.s32.totalorder %s20, 0
      %p75 = por %p73, %p74
      %p76 = scmp.ne.s32.totalorder %s68, %s70
      %p77 = scmp.eq.s32.totalorder %s25, 1
      %p78 = por %p76, %p77
      %p79 = scmp.ne.s32.totalorder %s70, %s71
      %p80 = scmp.eq.s32.totalorder %s25, 0
      %p81 = por %p79, %p80
      %p82 = scmp.ne.s32.totalorder %s70, %s71
      %p83 = scmp.eq.s32.totalorder %s26, 1
      %p84 = por %p82, %p83
      %p86 = scmp.ne.s32.totalorder %s71, %s85
      %p87 = scmp.eq.s32.totalorder %s26, 0
      %p88 = por %p86, %p87
      %s90 = sadd.s32 %s89, 1
      %p93 = scmp.eq.s32.totalorder %s20, 1
      %p94 = scmp.ne.s32.totalorder %s89, %s91
      %p95 = scmp.eq.s32.totalorder %s20, 0
      %p96 = por %p94, %p95
      %p97 = scmp.ne.s32.totalorder %s89, %s91
      %p98 = scmp.eq.s32.totalorder %s25, 1
      %p99 = por %p97, %p98
      %p100 = scmp.ne.s32.totalorder %s91, %s92
      %p101 = scmp.eq.s32.totalorder %s25, 0
      %p102 = por %p100, %p101
      %p103 = scmp.ne.s32.totalorder %s91, %s92
      %p104 = scmp.eq.s32.totalorder %s26, 1
      %p105 = por %p103, %p104
      %p107 = scmp.ne.s32.totalorder %s92, %s106
      %p108 = scmp.eq.s32.totalorder %s26, 0
      %p109 = por %p107, %p108
      %s110 = ssub.s32 %s28, %s35
      %p111 = scmp.eq.s32.totalorder %s110, 0
      %s113 = sadd.s32 %s112, 1
      %s114 = scalar_select %p111, %s112, %s113
      %p117 = pneg %p111
      %p118 = scmp.eq.s32.totalorder %s20, 1
      %p119 = por %p117, %p118
      %p120 = scmp.ne.s32.totalorder %s112, %s115
      %p121 = scmp.eq.s32.totalorder %s20, 0
      %p122 = por %p120, %p121
      %p123 = scmp.ne.s32.totalorder %s112, %s115
      %p124 = scmp.eq.s32.totalorder %s25, 1
      %p125 = por %p123, %p124
      %p126 = scmp.ne.s32.totalorder %s115, %s116
      %p127 = scmp.eq.s32.totalorder %s25, 0
      %p128 = por %p126, %p127
      %p129 = scmp.ne.s32.totalorder %s115, %s116
      %p130 = scmp.eq.s32.totalorder %s26, 1
      %p131 = por %p129, %p130
      %p133 = scmp.ne.s32.totalorder %s116, %s132
      %p134 = scmp.eq.s32.totalorder %s26, 0
      %p135 = por %p133, %p134
      %s136 = ssub.s32 %s28, %s35
      %p137 = scmp.eq.s32.totalorder %s136, 0
      %s139 = sadd.s32 %s138, 1
      %s140 = scalar_select %p137, %s138, %s139
      %p143 = pneg %p137
      %p144 = scmp.eq.s32.totalorder %s20, 1
      %p145 = por %p143, %p144
      %p146 = scmp.ne.s32.totalorder %s138, %s141
      %p147 = scmp.eq.s32.totalorder %s20, 0
      %p148 = por %p146, %p147
      %p149 = scmp.ne.s32.totalorder %s138, %s141
      %p150 = scmp.eq.s32.totalorder %s25, 1
      %p151 = por %p149, %p150
      %p152 = scmp.ne.s32.totalorder %s141, %s142
      %p153 = scmp.eq.s32.totalorder %s25, 0
      %p154 = por %p152, %p153
      %p155 = scmp.ne.s32.totalorder %s141, %s142
      %p156 = scmp.eq.s32.totalorder %s26, 1
      %p157 = por %p155, %p156
      %p159 = scmp.ne.s32.totalorder %s142, %s158
      %p160 = scmp.eq.s32.totalorder %s26, 0
      %p161 = por %p159, %p160
      %s162 = ssub.s32 %s27, %s39
      %s163 = ssub.s32 %s28, %s35
      %s164 = sor.u32 %s162, %s163
      %p165 = scmp.eq.s32.totalorder %s164, 0
      %s167 = sadd.s32 %s166, 1
      %s168 = scalar_select %p165, %s166, %s167
      %p171 = pneg %p165
      %p172 = scmp.eq.s32.totalorder %s20, 1
      %p173 = por %p171, %p172
      %p174 = scmp.ne.s32.totalorder %s166, %s169
      %p175 = scmp.eq.s32.totalorder %s20, 0
      %p176 = por %p174, %p175
      %p177 = scmp.ne.s32.totalorder %s166, %s169
      %p178 = scmp.eq.s32.totalorder %s25, 1
      %p179 = por %p177, %p178
      %p180 = scmp.ne.s32.totalorder %s169, %s170
      %p181 = scmp.eq.s32.totalorder %s25, 0
      %p182 = por %p180, %p181
      %p183 = scmp.ne.s32.totalorder %s169, %s170
      %p184 = scmp.eq.s32.totalorder %s26, 1
      %p185 = por %p183, %p184
      %p187 = scmp.ne.s32.totalorder %s170, %s186
      %p188 = scmp.eq.s32.totalorder %s26, 0
      %p189 = por %p187, %p188
      %s190 = ssub.s32 %s27, %s39
      %s191 = ssub.s32 %s28, %s35
      %s192 = sor.u32 %s190, %s191
      %p193 = scmp.eq.s32.totalorder %s192, 0
      %s195 = sadd.s32 %s194, 1
      %s196 = scalar_select %p193, %s194, %s195
      %p199 = pneg %p193
      %p200 = scmp.eq.s32.totalorder %s20, 1
      %p201 = por %p199, %p200
      %p202 = scmp.ne.s32.totalorder %s194, %s197
      %p203 = scmp.eq.s32.totalorder %s20, 0
      %p204 = por %p202, %p203
      %p205 = scmp.ne.s32.totalorder %s194, %s197
      %p206 = scmp.eq.s32.totalorder %s25, 1
      %p207 = por %p205, %p206
      %p208 = scmp.ne.s32.totalorder %s197, %s198
      %p209 = scmp.eq.s32.totalorder %s25, 0
      %p210 = por %p208, %p209
      %p211 = scmp.ne.s32.totalorder %s197, %s198
      %p212 = scmp.eq.s32.totalorder %s26, 1
      %p213 = por %p211, %p212
      %p215 = scmp.ne.s32.totalorder %s198, %s214
      %p216 = scmp.eq.s32.totalorder %s26, 0
      %p217 = por %p215, %p216
      %s218 = ssub.s32 %s27, %s39
      %s219 = ssub.s32 %s28, %s35
      %s220 = sor.u32 %s218, %s219
      %p221 = scmp.eq.s32.totalorder %s220, 0
      %s223 = sadd.s32 %s222, 1
      %s224 = scalar_select %p221, %s222, %s223
      %p227 = pneg %p221
      %p228 = scmp.eq.s32.totalorder %s20, 1
      %p229 = por %p227, %p228
      %p230 = scmp.ne.s32.totalorder %s222, %s225
      %p231 = scmp.eq.s32.totalorder %s20, 0
      %p232 = por %p230, %p231
      %p233 = scmp.ne.s32.totalorder %s222, %s225
      %p234 = scmp.eq.s32.totalorder %s25, 1
      %p235 = por %p233, %p234
      %p236 = scmp.ne.s32.totalorder %s225, %s226
      %p237 = scmp.eq.s32.totalorder %s25, 0
      %p238 = por %p236, %p237
      %p239 = scmp.ne.s32.totalorder %s225, %s226
      %p240 = scmp.eq.s32.totalorder %s26, 1
      %p241 = por %p239, %p240
      %p243 = scmp.ne.s32.totalorder %s226, %s242
      %p244 = scmp.eq.s32.totalorder %s26, 0
      %p245 = por %p243, %p244
      %p246 = scmp.le.s32.totalorder 1, %s20
      %p247 = scmp.lt.s32.totalorder %s20, 3
      %p248 = pnand %p246, %p247
      %p249 = pneg %p248
      // Predicated region
      $region9: #{tpu_custom_call.1} parent=5 // pred_check
        _
      $region10: #{tpu_custom_call.1} parent=5 // pred_check_branch
        %251 = sbr.rel (%p248) target = $region12
      $region11: #{tpu_custom_call.1} parent=5 // pred_region
        %s252 = ssub.s32 %s20, 1
        // Predicated region
        $region13: #{tpu_custom_call.1} parent=11 // pred_check
          %p253 = pneg %p81
        $region14: #{tpu_custom_call.1} parent=11 // pred_check_branch
          %255 = sbr.rel (%p253) target = $region16
        $region15: #{tpu_custom_call.1} parent=11 // pred_region
          _
        $region16: #{tpu_custom_call.1} parent=11 // pred_fallthru
          _
        // Predicated region
        $region17: #{tpu_custom_call.1} parent=11 // pred_check
          %p256 = pneg %p102
        $region18: #{tpu_custom_call.1} parent=11 // pred_check_branch
          %258 = sbr.rel (%p256) target = $region20
        $region19: #{tpu_custom_call.1} parent=11 // pred_region
          _
        $region20: #{tpu_custom_call.1} parent=11 // pred_fallthru
          _
        // Predicated region
        $region21: #{tpu_custom_call.1} parent=11 // pred_check
          %p259 = pneg %p128
        $region22: #{tpu_custom_call.1} parent=11 // pred_check_branch
          %261 = sbr.rel (%p259) target = $region24
        $region23: #{tpu_custom_call.1} parent=11 // pred_region
          %p262 = scmp.lt.s32.totalorder %s30, 0
          %s263 = scalar_select %p262, %s30, 0
          %s264 = smul.addr %s263, 8
          %s265 = scalar_lea.vmem %s3, %s264
        $region24: #{tpu_custom_call.1} parent=11 // pred_fallthru
          _
        // Predicated region
        $region25: #{tpu_custom_call.1} parent=11 // pred_check
          %p266 = pneg %p154
        $region26: #{tpu_custom_call.1} parent=11 // pred_check_branch
          %268 = sbr.rel (%p266) target = $region28
        $region27: #{tpu_custom_call.1} parent=11 // pred_region
          %p269 = scmp.lt.s32.totalorder %s30, 0
          %s270 = scalar_select %p269, %s30, 0
          %s271 = smul.addr %s270, 8
          %s272 = scalar_lea.vmem %s4, %s271
        $region28: #{tpu_custom_call.1} parent=11 // pred_fallthru
          _
      $region12: #{tpu_custom_call.1} parent=5 // pred_fallthru
        _
      %p273 = scmp.lt.s32.totalorder %s20, 2
      // Predicated region
      $region29: #{tpu_custom_call.1} parent=5 // pred_check
        %p274 = pneg %p273
      $region30: #{tpu_custom_call.1} parent=5 // pred_check_branch
        %276 = sbr.rel (%p274) target = $region32
      $region31: #{tpu_custom_call.1} parent=5 // pred_region
        // Predicated region
        $region33: #{tpu_custom_call.1} parent=31 // pred_check
          %p277 = pneg %p54
        $region34: #{tpu_custom_call.1} parent=31 // pred_check_branch
          %279 = sbr.rel (%p277) target = $region36
        $region35: #{tpu_custom_call.1} parent=31 // pred_region
          %p280 = scmp.lt.s32.totalorder %s27, 1
          %s281 = scalar_select %p280, %s27, 1
          %p282 = scmp.lt.s32.totalorder %s28, 0
          %s283 = scalar_select %p282, %s28, 0
          %s284 = sadd.s32 %s283, %s281
          %s285 = smul.addr %s284, 4
          %s286 = scalar_lea.vmem %s0, %s285
        $region36: #{tpu_custom_call.1} parent=31 // pred_fallthru
          _
      $region32: #{tpu_custom_call.1} parent=5 // pred_fallthru
        _
      %p287 = scmp.le.s32.totalorder 1, %s20
      %p288 = scmp.lt.s32.totalorder %s20, 3
      %p289 = pnand %p287, %p288
      %p290 = pneg %p289
      // Predicated region
      $region37: #{tpu_custom_call.1} parent=5 // pred_check
        _
      $region38: #{tpu_custom_call.1} parent=5 // pred_check_branch
        %292 = sbr.rel (%p289) target = $region40
      $region39: #{tpu_custom_call.1} parent=5 // pred_region
        %s293 = ssub.s32 %s20, 1
        %p294 = scmp.lt.s32.totalorder %s29, 1
        %s295 = scalar_select %p294, %s29, 1
        %p296 = scmp.lt.s32.totalorder %s30, 0
        %s297 = scalar_select %p296, %s30, 0
        %s298 = sadd.s32 %s297, %s295
        %s299 = smul.addr %s298, 4
        %s300 = scalar_lea.vmem %s0, %s299
        %p301 = pneg %p60
        %p302 = pneg %p57
        %p303 = pneg %p81
        %p304 = pneg %p78
        %p305 = pneg %p102
        %p306 = pneg %p99
        %p307 = scmp.lt.s32.totalorder %s30, 0
        %s308 = scalar_select %p307, %s30, 0
        %s309 = smul.addr %s308, 8
        %s310 = scalar_lea.vmem %s3, %s309
        %p311 = pneg %p128
        %p312 = pneg %p125
        %p313 = scmp.lt.s32.totalorder %s30, 0
        %s314 = scalar_select %p313, %s30, 0
        %s315 = smul.addr %s314, 8
        %s316 = scalar_lea.vmem %s4, %s315
        %p317 = pneg %p154
        %p318 = pneg %p151
        %p319 = pneg %p182
        %p320 = pneg %p179
        %s321 = sand.u32 %s169, 1
        %s322 = scalar_lea.sflag [#allocation3], %s321
        %s323 = sand.u32 %s169, 1
        %s324 = smul.addr %s323, 16
        %s325 = scalar_lea.vmem [#allocation2], %s324
        %p326 = pneg %p210
        %p327 = pneg %p207
        %s328 = sand.u32 %s25, 1
        %s329 = scalar_lea.sflag [#allocation5], %s328
        %s330 = sand.u32 %s197, 1
        %s331 = smul.addr %s330, 4
        %s332 = scalar_lea.vmem [#allocation4], %s331
        %p333 = pneg %p238
        %p334 = pneg %p235
        %s335 = sand.u32 %s25, 1
        %s336 = scalar_lea.sflag [#allocation5], %s335
        %s337 = sand.u32 %s225, 1
        %s338 = smul.addr %s337, 4
        %s339 = scalar_lea.vmem [#allocation6], %s338
        %p340 = scmp.lt.s32.totalorder %s29, 1
        %s341 = scalar_select %p340, %s29, 1
        %p342 = scmp.lt.s32.totalorder %s30, 0
        %s343 = scalar_select %p342, %s30, 0
        %s344 = sadd.s32 %s343, %s341
        %s345 = smul.addr %s344, 4
        %s346 = scalar_lea.vmem %s0, %s345
        %p347 = scmp.lt.s32.totalorder %s30, 0
        %s348 = scalar_select %p347, %s30, 0
        %s349 = smul.addr %s348, 8
        %s350 = scalar_lea.vmem %s3, %s349
        %p351 = scmp.lt.s32.totalorder %s30, 0
        %s352 = scalar_select %p351, %s30, 0
        %s353 = smul.addr %s352, 8
        %s354 = scalar_lea.vmem %s4, %s353
        %v356 = vld [vmem:[%s346] sm:$0xf]
        %v357 = vld [vmem:[%s1] sm:$0xf]
        %v358 = vld [vmem:[%s1 + $0x4] sm:$0xf]
        %v359 = vld [vmem:[%s1 + $0x8] sm:$0xf]
        %v360 = vld [vmem:[%s1 + $0xc] sm:$0xf]
        %v361 = vld [vmem:[%s2] sm:$0x1]
        %v363 = vlaneseq
        %v364 = vshrl.u32 %v363, 7
        %v365 = vsub.s32 0, %v364
        %v366 = vrot.slane %v361, %v365
        %v372 = vunpack.c.l.b16 %v357
        %v373 = vunpack.c.l.b16 %v358
        %v374 = vunpack.c.l.b16 %v359
        %v375 = vunpack.c.l.b16 %v360
        %v376 = vpack.c.b16 %v373, %v372
        %v377 = vpack.c.b16 %v375, %v374
        %vm380 = vcmask 261120
        %v382 = vsel %vm380, %v356, 0
        %384 = vmatprep.subr.bf16.mxu0 0
        %385 = vmatpush1.bf16.msra.mxu0 0
        %386 = vmatprep.subr.bf16.mxu0 0
        %387 = vmatpush1.bf16.msra.mxu0 0
        %388 = vmatprep.subr.bf16.mxu0 0
        %389 = vmatpush1.bf16.msra.mxu0 0
        %390 = vmatprep.subr.bf16.mxu0 0
        %391 = vmatpush1.bf16.msra.mxu0 0
        %392 = vmatprep.subr.bf16.mxu0 0
        %393 = vmatpush1.bf16.msra.mxu0 0
        %394 = vmatprep.subr.bf16.mxu0 0
        %395 = vmatpush1.bf16.msra.mxu0 0
        %396 = vmatprep.subr.bf16.mxu0 0
        %397 = vmatpush1.bf16.msra.mxu0 %v377
        %398 = vmatprep.subr.bf16.mxu0 0
        %399 = vmatpush1.bf16.msra.mxu0 %v376
        %400 = vmatprep.subr.bf16.mxu0 0
        %401 = vmatpush2.bf16.msra.mxu0 0
        %402 = vmatprep.subr.bf16.mxu0 0
        %403 = vmatpush2.bf16.msra.mxu0 0
        %404 = vmatprep.subr.bf16.mxu0 0
        %405 = vmatpush2.bf16.msra.mxu0 0
        %406 = vmatprep.subr.bf16.mxu0 0
        %407 = vmatpush2.bf16.msra.mxu0 0
        %408 = vmatprep.subr.bf16.mxu0 0
        %409 = vmatpush2.bf16.msra.mxu0 0
        %410 = vmatprep.subr.bf16.mxu0 0
        %411 = vmatpush2.bf16.msra.mxu0 0
        %412 = vmatprep.subr.bf16.mxu0 0
        %413 = vmatpush2.bf16.msra.mxu0 0
        %414 = vmatprep.subr.bf16.mxu0 0
        %415 = vmatpush2.bf16.msra.mxu0 0
        %416 = vmatprep.mubr.bf16.mxu0 0
        %417 = vmatmul.mubr.bf16.gmra.mxu0 %v382
        %v418 = vpop.f32.mrf.mxu0
        %v419 = vadd.f32 %v366, %v418
        %v420 = vpop.f32.mrf.mxu0
        %v421 = vpop.f32.mrf.mxu0
        %v422 = vpop.f32.mrf.mxu0
        %423 = vdwg.mxu0
        %424 = vst.msk [vmem:[%s325] sm:$0xff] %vm380, %v419
        %426 = vrot.lane.b32.xlu0 %v419, 96
        %v427 = vpop.permute.xlu0 %426
        %s429 = scalar_lea.vmem %s325, 8 [#allocation2]
        %430 = vst.msk [vmem:[%s429] sm:$0xff] %vm380, %v427
        %v431 = vpack.c.bf16 %v419, %v419
        %v433 = vunpack.c.l.b16 %v431
        %v434 = vpack.c.b16 %v433, %v433
        %435 = vrot.lane.b32.xlu0 %v434, 96
        %v436 = vpop.permute.xlu0 %435
        %vm438 = vcmask 257024
        %439 = vst.msk [vmem:[%s339] sm:$0xf] %vm438, %v436
        %v440 = vld [vmem:[%s350] sm:$0xff]
        %v441 = vld [vmem:[%s354] sm:$0xff]
        %v442 = vmul.f32 %v440, %v419
        %443 = vrot.lane.b32.xlu0 %v419, 124
        %v444 = vpop.permute.xlu0 %443
        %v446 = vmul.f32 %v441, %v444
        %v447 = vsub.f32 %v442, %v446
        %v448 = vpack.c.bf16 %v447, %v447
        %vm449 = vcmask 27648
        %450 = vst.msk [vmem:[%s332] sm:$0xf] %vm449, %v448
        %v451 = vmul.f32 %v440, %v444
        %v452 = vmul.f32 %v441, %v419
        %v453 = vadd.f32 %v451, %v452
        %v454 = vpack.c.bf16 %v453, %v453
        %v456 = vunpack.c.l.b16 %v454
        %v457 = vpack.c.b16 %v456, %v456
        %458 = vrot.lane.b32.xlu0 %v457, 4
        %v459 = vpop.permute.xlu0 %458
        %vm461 = vcmask 60448
        %462 = vst.msk [vmem:[%s332] sm:$0xf] %vm461, %v459
        %463 = vrot.lane.b32.xlu0 %v419, 120
        %v464 = vpop.permute.xlu0 %463
        %v466 = vmul.f32 %v440, %v464
        %467 = vrot.lane.b32.xlu0 %v419, 116
        %v468 = vpop.permute.xlu0 %467
        %v470 = vmul.f32 %v441, %v468
        %v471 = vsub.f32 %v466, %v470
        %v472 = vpack.c.bf16 %v471, %v471
        %v474 = vunpack.c.l.b16 %v472
        %v475 = vpack.c.b16 %v474, %v474
        %476 = vrot.lane.b32.xlu0 %v475, 8
        %v477 = vpop.permute.xlu0 %476
        %vm479 = vcmask 93248
        %480 = vst.msk [vmem:[%s332] sm:$0xf] %vm479, %v477
        %v481 = vmul.f32 %v440, %v468
        %v482 = vmul.f32 %v441, %v464
        %v483 = vadd.f32 %v481, %v482
        %v484 = vpack.c.bf16 %v483, %v483
        %v486 = vunpack.c.l.b16 %v484
        %v487 = vpack.c.b16 %v486, %v486
        %488 = vrot.lane.b32.xlu0 %v487, 12
        %v489 = vpop.permute.xlu0 %488
        %vm491 = vcmask 126048
        %492 = vst.msk [vmem:[%s332] sm:$0xf] %vm491, %v489
        %493 = vrot.lane.b32.xlu0 %v419, 112
        %v494 = vpop.permute.xlu0 %493
        %v496 = vmul.f32 %v440, %v494
        %497 = vrot.lane.b32.xlu0 %v419, 108
        %v498 = vpop.permute.xlu0 %497
        %v500 = vmul.f32 %v441, %v498
        %v501 = vsub.f32 %v496, %v500
        %v502 = vpack.c.bf16 %v501, %v501
        %v504 = vunpack.c.l.b16 %v502
        %v505 = vpack.c.b16 %v504, %v504
        %506 = vrot.lane.b32.xlu0 %v505, 16
        %v507 = vpop.permute.xlu0 %506
        %vm509 = vcmask 158848
        %510 = vst.msk [vmem:[%s332] sm:$0xf] %vm509, %v507
        %v511 = vmul.f32 %v440, %v498
        %v512 = vmul.f32 %v441, %v494
        %v513 = vadd.f32 %v511, %v512
        %v514 = vpack.c.bf16 %v513, %v513
        %v516 = vunpack.c.l.b16 %v514
        %v517 = vpack.c.b16 %v516, %v516
        %518 = vrot.lane.b32.xlu0 %v517, 20
        %v519 = vpop.permute.xlu0 %518
        %vm521 = vcmask 191648
        %522 = vst.msk [vmem:[%s332] sm:$0xf] %vm521, %v519
        %523 = vrot.lane.b32.xlu0 %v419, 104
        %v524 = vpop.permute.xlu0 %523
        %v526 = vmul.f32 %v440, %v524
        %527 = vrot.lane.b32.xlu0 %v419, 100
        %v528 = vpop.permute.xlu0 %527
        %v530 = vmul.f32 %v441, %v528
        %v531 = vsub.f32 %v526, %v530
        %v532 = vpack.c.bf16 %v531, %v531
        %v534 = vunpack.c.l.b16 %v532
        %v535 = vpack.c.b16 %v534, %v534
        %536 = vrot.lane.b32.xlu0 %v535, 24
        %v537 = vpop.permute.xlu0 %536
        %vm539 = vcmask 224448
        %540 = vst.msk [vmem:[%s332] sm:$0xf] %vm539, %v537
        %v541 = vmul.f32 %v440, %v528
        %v542 = vmul.f32 %v441, %v524
        %v543 = vadd.f32 %v541, %v542
        %v544 = vpack.c.bf16 %v543, %v543
        %v546 = vunpack.c.l.b16 %v544
        %v547 = vpack.c.b16 %v546, %v546
        %548 = vrot.lane.b32.xlu0 %v547, 28
        %v549 = vpop.permute.xlu0 %548
        %vm551 = vcmask 257248
        %552 = vst.msk [vmem:[%s332] sm:$0xf] %vm551, %v549
        %s553 = sand.u32 %s169, 1
        %s554 = scalar_lea.sflag [#allocation3], %s553
        %s555 = sand.u32 %s169, 1
        %s556 = smul.addr %s555, 16
        %s557 = scalar_lea.vmem [#allocation2], %s556
        %s558 = sand.u32 %s25, 1
        %s559 = scalar_lea.sflag [#allocation5], %s558
        %s560 = sand.u32 %s197, 1
        %s561 = smul.addr %s560, 4
        %s562 = scalar_lea.vmem [#allocation4], %s561
        %s563 = sand.u32 %s25, 1
        %s564 = scalar_lea.sflag [#allocation5], %s563
        %s565 = sand.u32 %s225, 1
        %s566 = smul.addr %s565, 4
        %s567 = scalar_lea.vmem [#allocation6], %s566
        // Predicated region
        $region41: #{tpu_custom_call.1} parent=39 // pred_check
          %p568 = pneg %p179
        $region42: #{tpu_custom_call.1} parent=39 // pred_check_branch
          %570 = sbr.rel (%p568) target = $region44
        $region43: #{tpu_custom_call.1} parent=39 // pred_region
          %s572 = ssub.s32 256, 256
          %573 = vsyncadd %s554, %s572
          %s574 = sadd.s32 %s30, %s29
          %s575 = smul.addr %s574, 128
          %s576 = scalar_lea.hbm %s5, %s575
          %s577 = sshll.u32 %s557, 4
          %s578 = int_to_ptr.vmem [resolvable:$true] %s577
          %583 = dma.vmem_to_hbm [thread:$0]  %s578, 256, %s576, %s554, 128, 256, 8
        $region44: #{tpu_custom_call.1} parent=39 // pred_fallthru
          _
        // Predicated region
        $region45: #{tpu_custom_call.1} parent=39 // pred_check
          %p584 = pneg %p207
        $region46: #{tpu_custom_call.1} parent=39 // pred_check_branch
          %586 = sbr.rel (%p584) target = $region48
        $region47: #{tpu_custom_call.1} parent=39 // pred_region
          %s588 = ssub.s32 64, 64
          %589 = vsyncadd %s559, %s588
          %s590 = sadd.s32 %s30, %s29
          %s591 = smul.addr %s590, 64
          %s592 = scalar_lea.hbm %s6, %s591
          %s594 = sshll.u32 %s562, 4
          %s595 = int_to_ptr.vmem [resolvable:$true] %s594
          %597 = dma.vmem_to_hbm [thread:$0]  %s595, 64, %s592, %s559
        $region48: #{tpu_custom_call.1} parent=39 // pred_fallthru
          _
        // Predicated region
        $region49: #{tpu_custom_call.1} parent=39 // pred_check
          %p598 = pneg %p235
        $region50: #{tpu_custom_call.1} parent=39 // pred_check_branch
          %600 = sbr.rel (%p598) target = $region52
        $region51: #{tpu_custom_call.1} parent=39 // pred_region
          %s602 = ssub.s32 64, 64
          %603 = vsyncadd %s564, %s602
          %s604 = sadd.s32 %s30, %s29
          %s605 = smul.addr %s604, 64
          %s606 = scalar_lea.hbm %s7, %s605
          %s608 = sshll.u32 %s567, 4
          %s609 = int_to_ptr.vmem [resolvable:$true] %s608
          %611 = dma.vmem_to_hbm [thread:$0]  %s609, 64, %s606, %s564
        $region52: #{tpu_custom_call.1} parent=39 // pred_fallthru
          _
      $region40: #{tpu_custom_call.1} parent=5 // pred_fallthru
        _
      %p612 = scmp.le.s32.totalorder 2, %s20
      // Predicated region
      $region53: #{tpu_custom_call.1} parent=5 // pred_check
        %p613 = pneg %p612
      $region54: #{tpu_custom_call.1} parent=5 // pred_check_branch
        %615 = sbr.rel (%p613) target = $region56
      $region55: #{tpu_custom_call.1} parent=5 // pred_region
        %s616 = ssub.s32 %s20, 2
        // Predicated region
        $region57: #{tpu_custom_call.1} parent=55 // pred_check
          %p617 = pneg %p185
        $region58: #{tpu_custom_call.1} parent=55 // pred_check_branch
          %619 = sbr.rel (%p617) target = $region60
        $region59: #{tpu_custom_call.1} parent=55 // pred_region
          %s620 = sand.u32 %s170, 1
          %s621 = scalar_lea.sflag [#allocation3], %s620
          %s622 = sand.u32 %s170, 1
          %s623 = smul.addr %s622, 16
          %s624 = scalar_lea.vmem [#allocation2], %s623
          %625 = dma.done %s621, 256
        $region60: #{tpu_custom_call.1} parent=55 // pred_fallthru
          _
        // Predicated region
        $region61: #{tpu_custom_call.1} parent=55 // pred_check
          %p626 = pneg %p213
        $region62: #{tpu_custom_call.1} parent=55 // pred_check_branch
          %628 = sbr.rel (%p626) target = $region64
        $region63: #{tpu_custom_call.1} parent=55 // pred_region
          %s629 = sand.u32 %s26, 1
          %s630 = scalar_lea.sflag [#allocation5], %s629
          %s631 = sand.u32 %s198, 1
          %s632 = smul.addr %s631, 4
          %s633 = scalar_lea.vmem [#allocation4], %s632
          %634 = dma.done %s630, 64
        $region64: #{tpu_custom_call.1} parent=55 // pred_fallthru
          _
        // Predicated region
        $region65: #{tpu_custom_call.1} parent=55 // pred_check
          %p635 = pneg %p241
        $region66: #{tpu_custom_call.1} parent=55 // pred_check_branch
          %637 = sbr.rel (%p635) target = $region68
        $region67: #{tpu_custom_call.1} parent=55 // pred_region
          %s638 = sand.u32 %s26, 1
          %s639 = scalar_lea.sflag [#allocation5], %s638
          %s640 = sand.u32 %s226, 1
          %s641 = smul.addr %s640, 4
          %s642 = scalar_lea.vmem [#allocation6], %s641
          %643 = dma.done %s639, 64
        $region68: #{tpu_custom_call.1} parent=55 // pred_fallthru
          _
      $region56: #{tpu_custom_call.1} parent=5 // pred_fallthru
        _
    $region6: #{tpu_custom_call.1} parent=1 // loop_footer
      %s24 = sadd.s32 1, %s20
    $region7: #{tpu_custom_call.1} parent=1 // loop_footer_branch
      %19 = sbr.rel target = $region3
    $region8: #{tpu_custom_call.1} parent=1 // loop_exit
      _
    %644 = vsyncpa [#allocation3], 1
    %s645 = scalar_lea.sflag [#allocation3], 1
    %646 = vsyncpa %s645, 1
    %647 = vsyncpa [#allocation5], 1
    %s648 = scalar_lea.sflag [#allocation5], 1
    %649 = vsyncpa %s648, 1

// kernel: tpu_custom_call.1
$region0: #{tpu_custom_call.1}
  #allocation0 [shape = 'u32[]', space=smem, size = 0x4, offset = 0x4, fixed_abs, tag = 'smem constant byte address 0x4 - core index']
  #allocation1 [shape = 'u32[144,128]{1,0:T(1,128)}', space=vmem, size = 0x12000, scoped, tag = 'internal scratch']
  %s0 = inlined_call_operand.vmem [shape: bf16[2,8,32], index: 0, kind: input, shape index: {}]
  %s1 = inlined_call_operand.vmem [shape: bf16[32,64], index: 1, kind: input, shape index: {}]
  %s2 = inlined_call_operand.vmem [shape: f32[1,64], index: 2, kind: input, shape index: {}]
  %s3 = inlined_call_operand.vmem [shape: f32[8,4], index: 3, kind: input, shape index: {}]
  %s4 = inlined_call_operand.vmem [shape: f32[8,4], index: 4, kind: input, shape index: {}]
  %s5 = inlined_call_operand.hbm [shape: f32[2,2,8,32], index: 5, kind: output, shape index: {0}]
  %s6 = inlined_call_operand.hbm [shape: bf16[2,8,32], index: 6, kind: output, shape index: {1}]
  %s7 = inlined_call_operand.hbm [shape: bf16[2,8,32], index: 7, kind: output, shape index: {2}]
  %8 = xla_tuple %s5, %s6, %s7
  %s9 = sld [smem:[#allocation0]]
  $region69: #{tpu_custom_call.1} parent=0
    _
  %s11 = ssub.s32 1, %s9
  %s12 = scalar_select 0, %s11, %s9
  $region1: #{tpu_custom_call.1} parent=0
    #allocation2 [shape = 'u8[16384]{0}', space=vmem, size = 0x4000, scoped, tag = 'output window, operand 0']
    #allocation3 [shape = 's32[2]{0}', space=sflag, size = 0x8, scoped, tag = 'scoped memory for tpu_custom_call.1']
    #allocation4 [shape = 'u8[4096]{0}', space=vmem, size = 0x1000, scoped, tag = 'output window, operand 1']
    #allocation5 [shape = 's32[2]{0}', space=sflag, size = 0x8, scoped, tag = 'scoped memory for tpu_custom_call.1']
    #allocation6 [shape = 'u8[4096]{0}', space=vmem, size = 0x1000, scoped, tag = 'output window, operand 2']
    %13 = vsyncpa [#allocation3], 0
    %s14 = scalar_lea.sflag [#allocation3], 1
    %15 = vsyncpa %s14, 0
    %16 = vsyncpa [#allocation5], 0
    %s17 = scalar_lea.sflag [#allocation5], 1
    %18 = vsyncpa %s17, 0
    loop: start=0, step=1, limit=4
    $region2: #{tpu_custom_call.1} parent=1 // loop_pre_header
      _
    $region3: #{tpu_custom_call.1} parent=1 // loop_header
      %s20 = sphi 0, %s24
      %p21 = scmp.ge.s32.totalorder %s20, 4
      %s27 = sphi 0, %s39
      %s28 = sphi 0, %s35
      %s29 = sphi 0, %s27
      %s30 = sphi 0, %s28
      %s31 = sphi 0, %s29
      %s32 = sphi 0, %s30
      %s44 = sphi 0, %s46
      %s47 = sphi 0, %s44
      %s48 = sphi 0, %s47
      %s64 = sphi 0, %s48
      %s68 = sphi 0, %s68
      %s70 = sphi 0, %s68
      %s71 = sphi 0, %s70
      %s85 = sphi 0, %s71
      %s89 = sphi 0, %s89
      %s91 = sphi 0, %s89
      %s92 = sphi 0, %s91
      %s106 = sphi 0, %s92
      %s112 = sphi 0, %s114
      %s115 = sphi 0, %s112
      %s116 = sphi 0, %s115
      %s132 = sphi 0, %s116
      %s138 = sphi 0, %s140
      %s141 = sphi 0, %s138
      %s142 = sphi 0, %s141
      %s158 = sphi 0, %s142
      %s166 = sphi 0, %s168
      %s169 = sphi 0, %s166
      %s170 = sphi 0, %s169
      %s186 = sphi 0, %s170
      %s194 = sphi 0, %s196
      %s197 = sphi 0, %s194
      %s198 = sphi 0, %s197
      %s214 = sphi 0, %s198
      %s222 = sphi 0, %s224
      %s225 = sphi 0, %s222
      %s226 = sphi 0, %s225
      %s242 = sphi 0, %s226
    $region4: #{tpu_custom_call.1} parent=1 // loop_header_branch
      %23 = sbr.rel (%p21) target = $region8
    $region5: #{tpu_custom_call.1} parent=1 // loop_body
      %s25 = ssub.s32 %s20, 1
      %s26 = ssub.s32 %s20, 2
      %s33 = sadd.s32 1, %s28
      %p34 = scmp.ge.s32.totalorder %s33, 1
      %s35 = scalar_select %p34, 0, %s33
      %s36 = sadd.s32 1, %s27
      %s37 = scalar_select %p34, %s36, %s27
      %p38 = scmp.ge.s32.totalorder %s37, 2
      %s39 = scalar_select %p38, 0, %s37
      %s40 = ssub.s32 %s27, %s39
      %s41 = ssub.s32 %s28, %s35
      %s42 = sor.u32 %s40, %s41
      %p43 = scmp.eq.s32.totalorder %s42, 0
      %s45 = sadd.s32 %s44, 1
      %s46 = scalar_select %p43, %s44, %s45
      %p49 = pneg %p43
      %p50 = scmp.eq.s32.totalorder %s20, 1
      %p51 = por %p49, %p50
      %p52 = scmp.ne.s32.totalorder %s44, %s47
      %p53 = scmp.eq.s32.totalorder %s20, 0
      %p54 = por %p52, %p53
      %p55 = scmp.ne.s32.totalorder %s44, %s47
      %p56 = scmp.eq.s32.totalorder %s25, 1
      %p57 = por %p55, %p56
      %p58 = scmp.ne.s32.totalorder %s47, %s48
      %p59 = scmp.eq.s32.totalorder %s25, 0
      %p60 = por %p58, %p59
      %p61 = scmp.ne.s32.totalorder %s47, %s48
      %p62 = scmp.eq.s32.totalorder %s26, 1
      %p63 = por %p61, %p62
      %p65 = scmp.ne.s32.totalorder %s48, %s64
      %p66 = scmp.eq.s32.totalorder %s26, 0
      %p67 = por %p65, %p66
      %s69 = sadd.s32 %s68, 1
      %p72 = scmp.eq.s32.totalorder %s20, 1
      %p73 = scmp.ne.s32.totalorder %s68, %s70
      %p74 = scmp.eq.s32.totalorder %s20, 0
      %p75 = por %p73, %p74
      %p76 = scmp.ne.s32.totalorder %s68, %s70
      %p77 = scmp.eq.s32.totalorder %s25, 1
      %p78 = por %p76, %p77
      %p79 = scmp.ne.s32.totalorder %s70, %s71
      %p80 = scmp.eq.s32.totalorder %s25, 0
      %p81 = por %p79, %p80
      %p82 = scmp.ne.s32.totalorder %s70, %s71
      %p83 = scmp.eq.s32.totalorder %s26, 1
      %p84 = por %p82, %p83
      %p86 = scmp.ne.s32.totalorder %s71, %s85
      %p87 = scmp.eq.s32.totalorder %s26, 0
      %p88 = por %p86, %p87
      %s90 = sadd.s32 %s89, 1
      %p93 = scmp.eq.s32.totalorder %s20, 1
      %p94 = scmp.ne.s32.totalorder %s89, %s91
      %p95 = scmp.eq.s32.totalorder %s20, 0
      %p96 = por %p94, %p95
      %p97 = scmp.ne.s32.totalorder %s89, %s91
      %p98 = scmp.eq.s32.totalorder %s25, 1
      %p99 = por %p97, %p98
      %p100 = scmp.ne.s32.totalorder %s91, %s92
      %p101 = scmp.eq.s32.totalorder %s25, 0
      %p102 = por %p100, %p101
      %p103 = scmp.ne.s32.totalorder %s91, %s92
      %p104 = scmp.eq.s32.totalorder %s26, 1
      %p105 = por %p103, %p104
      %p107 = scmp.ne.s32.totalorder %s92, %s106
      %p108 = scmp.eq.s32.totalorder %s26, 0
      %p109 = por %p107, %p108
      %s110 = ssub.s32 %s28, %s35
      %p111 = scmp.eq.s32.totalorder %s110, 0
      %s113 = sadd.s32 %s112, 1
      %s114 = scalar_select %p111, %s112, %s113
      %p117 = pneg %p111
      %p118 = scmp.eq.s32.totalorder %s20, 1
      %p119 = por %p117, %p118
      %p120 = scmp.ne.s32.totalorder %s112, %s115
      %p121 = scmp.eq.s32.totalorder %s20, 0
      %p122 = por %p120, %p121
      %p123 = scmp.ne.s32.totalorder %s112, %s115
      %p124 = scmp.eq.s32.totalorder %s25, 1
      %p125 = por %p123, %p124
      %p126 = scmp.ne.s32.totalorder %s115, %s116
      %p127 = scmp.eq.s32.totalorder %s25, 0
      %p128 = por %p126, %p127
      %p129 = scmp.ne.s32.totalorder %s115, %s116
      %p130 = scmp.eq.s32.totalorder %s26, 1
      %p131 = por %p129, %p130
      %p133 = scmp.ne.s32.totalorder %s116, %s132
      %p134 = scmp.eq.s32.totalorder %s26, 0
      %p135 = por %p133, %p134
      %s136 = ssub.s32 %s28, %s35
      %p137 = scmp.eq.s32.totalorder %s136, 0
      %s139 = sadd.s32 %s138, 1
      %s140 = scalar_select %p137, %s138, %s139
      %p143 = pneg %p137
      %p144 = scmp.eq.s32.totalorder %s20, 1
      %p145 = por %p143, %p144
      %p146 = scmp.ne.s32.totalorder %s138, %s141
      %p147 = scmp.eq.s32.totalorder %s20, 0
      %p148 = por %p146, %p147
      %p149 = scmp.ne.s32.totalorder %s138, %s141
      %p150 = scmp.eq.s32.totalorder %s25, 1
      %p151 = por %p149, %p150
      %p152 = scmp.ne.s32.totalorder %s141, %s142
      %p153 = scmp.eq.s32.totalorder %s25, 0
      %p154 = por %p152, %p153
      %p155 = scmp.ne.s32.totalorder %s141, %s142
      %p156 = scmp.eq.s32.totalorder %s26, 1
      %p157 = por %p155, %p156
      %p159 = scmp.ne.s32.totalorder %s142, %s158
      %p160 = scmp.eq.s32.totalorder %s26, 0
      %p161 = por %p159, %p160
      %s162 = ssub.s32 %s27, %s39
      %s163 = ssub.s32 %s28, %s35
      %s164 = sor.u32 %s162, %s163
      %p165 = scmp.eq.s32.totalorder %s164, 0
      %s167 = sadd.s32 %s166, 1
      %s168 = scalar_select %p165, %s166, %s167
      %p171 = pneg %p165
      %p172 = scmp.eq.s32.totalorder %s20, 1
      %p173 = por %p171, %p172
      %p174 = scmp.ne.s32.totalorder %s166, %s169
      %p175 = scmp.eq.s32.totalorder %s20, 0
      %p176 = por %p174, %p175
      %p177 = scmp.ne.s32.totalorder %s166, %s169
      %p178 = scmp.eq.s32.totalorder %s25, 1
      %p179 = por %p177, %p178
      %p180 = scmp.ne.s32.totalorder %s169, %s170
      %p181 = scmp.eq.s32.totalorder %s25, 0
      %p182 = por %p180, %p181
      %p183 = scmp.ne.s32.totalorder %s169, %s170
      %p184 = scmp.eq.s32.totalorder %s26, 1
      %p185 = por %p183, %p184
      %p187 = scmp.ne.s32.totalorder %s170, %s186
      %p188 = scmp.eq.s32.totalorder %s26, 0
      %p189 = por %p187, %p188
      %s190 = ssub.s32 %s27, %s39
      %s191 = ssub.s32 %s28, %s35
      %s192 = sor.u32 %s190, %s191
      %p193 = scmp.eq.s32.totalorder %s192, 0
      %s195 = sadd.s32 %s194, 1
      %s196 = scalar_select %p193, %s194, %s195
      %p199 = pneg %p193
      %p200 = scmp.eq.s32.totalorder %s20, 1
      %p201 = por %p199, %p200
      %p202 = scmp.ne.s32.totalorder %s194, %s197
      %p203 = scmp.eq.s32.totalorder %s20, 0
      %p204 = por %p202, %p203
      %p205 = scmp.ne.s32.totalorder %s194, %s197
      %p206 = scmp.eq.s32.totalorder %s25, 1
      %p207 = por %p205, %p206
      %p208 = scmp.ne.s32.totalorder %s197, %s198
      %p209 = scmp.eq.s32.totalorder %s25, 0
      %p210 = por %p208, %p209
      %p211 = scmp.ne.s32.totalorder %s197, %s198
      %p212 = scmp.eq.s32.totalorder %s26, 1
      %p213 = por %p211, %p212
      %p215 = scmp.ne.s32.totalorder %s198, %s214
      %p216 = scmp.eq.s32.totalorder %s26, 0
      %p217 = por %p215, %p216
      %s218 = ssub.s32 %s27, %s39
      %s219 = ssub.s32 %s28, %s35
      %s220 = sor.u32 %s218, %s219
      %p221 = scmp.eq.s32.totalorder %s220, 0
      %s223 = sadd.s32 %s222, 1
      %s224 = scalar_select %p221, %s222, %s223
      %p227 = pneg %p221
      %p228 = scmp.eq.s32.totalorder %s20, 1
      %p229 = por %p227, %p228
      %p230 = scmp.ne.s32.totalorder %s222, %s225
      %p231 = scmp.eq.s32.totalorder %s20, 0
      %p232 = por %p230, %p231
      %p233 = scmp.ne.s32.totalorder %s222, %s225
      %p234 = scmp.eq.s32.totalorder %s25, 1
      %p235 = por %p233, %p234
      %p236 = scmp.ne.s32.totalorder %s225, %s226
      %p237 = scmp.eq.s32.totalorder %s25, 0
      %p238 = por %p236, %p237
      %p239 = scmp.ne.s32.totalorder %s225, %s226
      %p240 = scmp.eq.s32.totalorder %s26, 1
      %p241 = por %p239, %p240
      %p243 = scmp.ne.s32.totalorder %s226, %s242
      %p244 = scmp.eq.s32.totalorder %s26, 0
      %p245 = por %p243, %p244
      %p246 = scmp.le.s32.totalorder 1, %s20
      %p247 = scmp.lt.s32.totalorder %s20, 3
      %p248 = pnand %p246, %p247
      %p249 = pneg %p248
      // Predicated region
      $region9: #{tpu_custom_call.1} parent=5 // pred_check
        _
      $region10: #{tpu_custom_call.1} parent=5 // pred_check_branch
        %251 = sbr.rel (%p248) target = $region12
      $region11: #{tpu_custom_call.1} parent=5 // pred_region
        %s252 = ssub.s32 %s20, 1
        // Predicated region
        $region13: #{tpu_custom_call.1} parent=11 // pred_check
          %p253 = pneg %p81
        $region14: #{tpu_custom_call.1} parent=11 // pred_check_branch
          %255 = sbr.rel (%p253) target = $region16
        $region15: #{tpu_custom_call.1} parent=11 // pred_region
          _
        $region16: #{tpu_custom_call.1} parent=11 // pred_fallthru
          _
        // Predicated region
        $region17: #{tpu_custom_call.1} parent=11 // pred_check
          %p256 = pneg %p102
        $region18: #{tpu_custom_call.1} parent=11 // pred_check_branch
          %258 = sbr.rel (%p256) target = $region20
        $region19: #{tpu_custom_call.1} parent=11 // pred_region
          _
        $region20: #{tpu_custom_call.1} parent=11 // pred_fallthru
          _
        // Predicated region
        $region21: #{tpu_custom_call.1} parent=11 // pred_check
          %p259 = pneg %p128
        $region22: #{tpu_custom_call.1} parent=11 // pred_check_branch
          %261 = sbr.rel (%p259) target = $region24
        $region23: #{tpu_custom_call.1} parent=11 // pred_region
          %p262 = scmp.lt.s32.totalorder %s30, 0
          %s263 = scalar_select %p262, %s30, 0
          %s264 = smul.addr %s263, 8
          %s265 = scalar_lea.vmem %s3, %s264
        $region24: #{tpu_custom_call.1} parent=11 // pred_fallthru
          _
        // Predicated region
        $region25: #{tpu_custom_call.1} parent=11 // pred_check
          %p266 = pneg %p154
        $region26: #{tpu_custom_call.1} parent=11 // pred_check_branch
          %268 = sbr.rel (%p266) target = $region28
        $region27: #{tpu_custom_call.1} parent=11 // pred_region
          %p269 = scmp.lt.s32.totalorder %s30, 0
          %s270 = scalar_select %p269, %s30, 0
          %s271 = smul.addr %s270, 8
          %s272 = scalar_lea.vmem %s4, %s271
        $region28: #{tpu_custom_call.1} parent=11 // pred_fallthru
          _
      $region12: #{tpu_custom_call.1} parent=5 // pred_fallthru
        _
      %p273 = scmp.lt.s32.totalorder %s20, 2
      // Predicated region
      $region29: #{tpu_custom_call.1} parent=5 // pred_check
        %p274 = pneg %p273
      $region30: #{tpu_custom_call.1} parent=5 // pred_check_branch
        %276 = sbr.rel (%p274) target = $region32
      $region31: #{tpu_custom_call.1} parent=5 // pred_region
        // Predicated region
        $region33: #{tpu_custom_call.1} parent=31 // pred_check
          %p277 = pneg %p54
        $region34: #{tpu_custom_call.1} parent=31 // pred_check_branch
          %279 = sbr.rel (%p277) target = $region36
        $region35: #{tpu_custom_call.1} parent=31 // pred_region
          %p280 = scmp.lt.s32.totalorder %s27, 1
          %s281 = scalar_select %p280, %s27, 1
          %p282 = scmp.lt.s32.totalorder %s28, 0
          %s283 = scalar_select %p282, %s28, 0
          %s284 = sadd.s32 %s283, %s281
          %s285 = smul.addr %s284, 4
          %s286 = scalar_lea.vmem %s0, %s285
        $region36: #{tpu_custom_call.1} parent=31 // pred_fallthru
          _
      $region32: #{tpu_custom_call.1} parent=5 // pred_fallthru
        _
      %p287 = scmp.le.s32.totalorder 1, %s20
      %p288 = scmp.lt.s32.totalorder %s20, 3
      %p289 = pnand %p287, %p288
      %p290 = pneg %p289
      // Predicated region
      $region37: #{tpu_custom_call.1} parent=5 // pred_check
        _
      $region38: #{tpu_custom_call.1} parent=5 // pred_check_branch
        %292 = sbr.rel (%p289) target = $region40
      $region39: #{tpu_custom_call.1} parent=5 // pred_region
        %s293 = ssub.s32 %s20, 1
        %p294 = scmp.lt.s32.totalorder %s29, 1
        %s295 = scalar_select %p294, %s29, 1
        %p296 = scmp.lt.s32.totalorder %s30, 0
        %s297 = scalar_select %p296, %s30, 0
        %s298 = sadd.s32 %s297, %s295
        %s299 = smul.addr %s298, 4
        %s300 = scalar_lea.vmem %s0, %s299
        %p301 = pneg %p60
        %p302 = pneg %p57
        %p303 = pneg %p81
        %p304 = pneg %p78
        %p305 = pneg %p102
        %p306 = pneg %p99
        %p307 = scmp.lt.s32.totalorder %s30, 0
        %s308 = scalar_select %p307, %s30, 0
        %s309 = smul.addr %s308, 8
        %s310 = scalar_lea.vmem %s3, %s309
        %p311 = pneg %p128
        %p312 = pneg %p125
        %p313 = scmp.lt.s32.totalorder %s30, 0
        %s314 = scalar_select %p313, %s30, 0
        %s315 = smul.addr %s314, 8
        %s316 = scalar_lea.vmem %s4, %s315
        %p317 = pneg %p154
        %p318 = pneg %p151
        %p319 = pneg %p182
        %p320 = pneg %p179
        %s321 = sand.u32 %s169, 1
        %s322 = scalar_lea.sflag [#allocation3], %s321
        %s323 = sand.u32 %s169, 1
        %s324 = smul.addr %s323, 16
        %s325 = scalar_lea.vmem [#allocation2], %s324
        %p326 = pneg %p210
        %p327 = pneg %p207
        %s328 = sand.u32 %s25, 1
        %s329 = scalar_lea.sflag [#allocation5], %s328
        %s330 = sand.u32 %s197, 1
        %s331 = smul.addr %s330, 4
        %s332 = scalar_lea.vmem [#allocation4], %s331
        %p333 = pneg %p238
        %p334 = pneg %p235
        %s335 = sand.u32 %s25, 1
        %s336 = scalar_lea.sflag [#allocation5], %s335
        %s337 = sand.u32 %s225, 1
        %s338 = smul.addr %s337, 4
        %s339 = scalar_lea.vmem [#allocation6], %s338
        %p340 = scmp.lt.s32.totalorder %s29, 1
        %s341 = scalar_select %p340, %s29, 1
        %p342 = scmp.lt.s32.totalorder %s30, 0
        %s343 = scalar_select %p342, %s30, 0
        %s344 = sadd.s32 %s343, %s341
        %s345 = smul.addr %s344, 4
        %s346 = scalar_lea.vmem %s0, %s345
        %p347 = scmp.lt.s32.totalorder %s30, 0
        %s348 = scalar_select %p347, %s30, 0
        %s349 = smul.addr %s348, 8
        %s350 = scalar_lea.vmem %s3, %s349
        %p351 = scmp.lt.s32.totalorder %s30, 0
        %s352 = scalar_select %p351, %s30, 0
        %s353 = smul.addr %s352, 8
        %s354 = scalar_lea.vmem %s4, %s353
        %v356 = vld [vmem:[%s346] sm:$0xf]
        %v357 = vld [vmem:[%s1] sm:$0xf]
        %v358 = vld [vmem:[%s1 + $0x4] sm:$0xf]
        %v359 = vld [vmem:[%s1 + $0x8] sm:$0xf]
        %v360 = vld [vmem:[%s1 + $0xc] sm:$0xf]
        %v361 = vld [vmem:[%s2] sm:$0x1]
        %v363 = vlaneseq
        %v364 = vshrl.u32 %v363, 7
        %v365 = vsub.s32 0, %v364
        %v366 = vrot.slane %v361, %v365
        %v372 = vunpack.c.l.b16 %v357
        %v373 = vunpack.c.l.b16 %v358
        %v374 = vunpack.c.l.b16 %v359
        %v375 = vunpack.c.l.b16 %v360
        %v376 = vpack.c.b16 %v373, %v372
        %v377 = vpack.c.b16 %v375, %v374
        %vm380 = vcmask 261120
        %v382 = vsel %vm380, %v356, 0
        %384 = vmatprep.subr.bf16.mxu0 0
        %385 = vmatpush1.bf16.msra.mxu0 0
        %386 = vmatprep.subr.bf16.mxu0 0
        %387 = vmatpush1.bf16.msra.mxu0 0
        %388 = vmatprep.subr.bf16.mxu0 0
        %389 = vmatpush1.bf16.msra.mxu0 0
        %390 = vmatprep.subr.bf16.mxu0 0
        %391 = vmatpush1.bf16.msra.mxu0 0
        %392 = vmatprep.subr.bf16.mxu0 0
        %393 = vmatpush1.bf16.msra.mxu0 0
        %394 = vmatprep.subr.bf16.mxu0 0
        %395 = vmatpush1.bf16.msra.mxu0 0
        %396 = vmatprep.subr.bf16.mxu0 0
        %397 = vmatpush1.bf16.msra.mxu0 %v377
        %398 = vmatprep.subr.bf16.mxu0 0
        %399 = vmatpush1.bf16.msra.mxu0 %v376
        %400 = vmatprep.subr.bf16.mxu0 0
        %401 = vmatpush2.bf16.msra.mxu0 0
        %402 = vmatprep.subr.bf16.mxu0 0
        %403 = vmatpush2.bf16.msra.mxu0 0
        %404 = vmatprep.subr.bf16.mxu0 0
        %405 = vmatpush2.bf16.msra.mxu0 0
        %406 = vmatprep.subr.bf16.mxu0 0
        %407 = vmatpush2.bf16.msra.mxu0 0
        %408 = vmatprep.subr.bf16.mxu0 0
        %409 = vmatpush2.bf16.msra.mxu0 0
        %410 = vmatprep.subr.bf16.mxu0 0
        %411 = vmatpush2.bf16.msra.mxu0 0
        %412 = vmatprep.subr.bf16.mxu0 0
        %413 = vmatpush2.bf16.msra.mxu0 0
        %414 = vmatprep.subr.bf16.mxu0 0
        %415 = vmatpush2.bf16.msra.mxu0 0
        %416 = vmatprep.mubr.bf16.mxu0 0
        %417 = vmatmul.mubr.bf16.gmra.mxu0 %v382
        %v418 = vpop.f32.mrf.mxu0
        %v419 = vadd.f32 %v366, %v418
        %v420 = vpop.f32.mrf.mxu0
        %v421 = vpop.f32.mrf.mxu0
        %v422 = vpop.f32.mrf.mxu0
        %423 = vdwg.mxu0
        %424 = vst.msk [vmem:[%s325] sm:$0xff] %vm380, %v419
        %426 = vrot.lane.b32.xlu0 %v419, 96
        %v427 = vpop.permute.xlu0 %426
        %s429 = scalar_lea.vmem %s325, 8 [#allocation2]
        %430 = vst.msk [vmem:[%s429] sm:$0xff] %vm380, %v427
        %v431 = vpack.c.bf16 %v419, %v419
        %v433 = vunpack.c.l.b16 %v431
        %v434 = vpack.c.b16 %v433, %v433
        %435 = vrot.lane.b32.xlu0 %v434, 96
        %v436 = vpop.permute.xlu0 %435
        %vm438 = vcmask 257024
        %439 = vst.msk [vmem:[%s339] sm:$0xf] %vm438, %v436
        %v440 = vld [vmem:[%s350] sm:$0xff]
        %v441 = vld [vmem:[%s354] sm:$0xff]
        %v442 = vmul.f32 %v440, %v419
        %443 = vrot.lane.b32.xlu0 %v419, 124
        %v444 = vpop.permute.xlu0 %443
        %v446 = vmul.f32 %v441, %v444
        %v447 = vsub.f32 %v442, %v446
        %v448 = vpack.c.bf16 %v447, %v447
        %vm449 = vcmask 27648
        %450 = vst.msk [vmem:[%s332] sm:$0xf] %vm449, %v448
        %v451 = vmul.f32 %v440, %v444
        %v452 = vmul.f32 %v441, %v419
        %v453 = vadd.f32 %v451, %v452
        %v454 = vpack.c.bf16 %v453, %v453
        %v456 = vunpack.c.l.b16 %v454
        %v457 = vpack.c.b16 %v456, %v456
        %458 = vrot.lane.b32.xlu0 %v457, 4
        %v459 = vpop.permute.xlu0 %458
        %vm461 = vcmask 60448
        %462 = vst.msk [vmem:[%s332] sm:$0xf] %vm461, %v459
        %463 = vrot.lane.b32.xlu0 %v419, 120
        %v464 = vpop.permute.xlu0 %463
        %v466 = vmul.f32 %v440, %v464
        %467 = vrot.lane.b32.xlu0 %v419, 116
        %v468 = vpop.permute.xlu0 %467
        %v470 = vmul.f32 %v441, %v468
        %v471 = vsub.f32 %v466, %v470
        %v472 = vpack.c.bf16 %v471, %v471
        %v474 = vunpack.c.l.b16 %v472
        %v475 = vpack.c.b16 %v474, %v474
        %476 = vrot.lane.b32.xlu0 %v475, 8
        %v477 = vpop.permute.xlu0 %476
        %vm479 = vcmask 93248
        %480 = vst.msk [vmem:[%s332] sm:$0xf] %vm479, %v477
        %v481 = vmul.f32 %v440, %v468
        %v482 = vmul.f32 %v441, %v464
        %v483 = vadd.f32 %v481, %v482
        %v484 = vpack.c.bf16 %v483, %v483
        %v486 = vunpack.c.l.b16 %v484
        %v487 = vpack.c.b16 %v486, %v486
        %488 = vrot.lane.b32.xlu0 %v487, 12
        %v489 = vpop.permute.xlu0 %488
        %vm491 = vcmask 126048
        %492 = vst.msk [vmem:[%s332] sm:$0xf] %vm491, %v489
        %493 = vrot.lane.b32.xlu0 %v419, 112
        %v494 = vpop.permute.xlu0 %493
        %v496 = vmul.f32 %v440, %v494
        %497 = vrot.lane.b32.xlu0 %v419, 108
        %v498 = vpop.permute.xlu0 %497
        %v500 = vmul.f32 %v441, %v498
        %v501 = vsub.f32 %v496, %v500
        %v502 = vpack.c.bf16 %v501, %v501
        %v504 = vunpack.c.l.b16 %v502
        %v505 = vpack.c.b16 %v504, %v504
        %506 = vrot.lane.b32.xlu0 %v505, 16
        %v507 = vpop.permute.xlu0 %506
        %vm509 = vcmask 158848
        %510 = vst.msk [vmem:[%s332] sm:$0xf] %vm509, %v507
        %v511 = vmul.f32 %v440, %v498
        %v512 = vmul.f32 %v441, %v494
        %v513 = vadd.f32 %v511, %v512
        %v514 = vpack.c.bf16 %v513, %v513
        %v516 = vunpack.c.l.b16 %v514
        %v517 = vpack.c.b16 %v516, %v516
        %518 = vrot.lane.b32.xlu0 %v517, 20
        %v519 = vpop.permute.xlu0 %518
        %vm521 = vcmask 191648
        %522 = vst.msk [vmem:[%s332] sm:$0xf] %vm521, %v519
        %523 = vrot.lane.b32.xlu0 %v419, 104
        %v524 = vpop.permute.xlu0 %523
        %v526 = vmul.f32 %v440, %v524
        %527 = vrot.lane.b32.xlu0 %v419, 100
        %v528 = vpop.permute.xlu0 %527
        %v530 = vmul.f32 %v441, %v528
        %v531 = vsub.f32 %v526, %v530
        %v532 = vpack.c.bf16 %v531, %v531
        %v534 = vunpack.c.l.b16 %v532
        %v535 = vpack.c.b16 %v534, %v534
        %536 = vrot.lane.b32.xlu0 %v535, 24
        %v537 = vpop.permute.xlu0 %536
        %vm539 = vcmask 224448
        %540 = vst.msk [vmem:[%s332] sm:$0xf] %vm539, %v537
        %v541 = vmul.f32 %v440, %v528
        %v542 = vmul.f32 %v441, %v524
        %v543 = vadd.f32 %v541, %v542
        %v544 = vpack.c.bf16 %v543, %v543
        %v546 = vunpack.c.l.b16 %v544
        %v547 = vpack.c.b16 %v546, %v546
        %548 = vrot.lane.b32.xlu0 %v547, 28
        %v549 = vpop.permute.xlu0 %548
        %vm551 = vcmask 257248
        %552 = vst.msk [vmem:[%s332] sm:$0xf] %vm551, %v549
        %s553 = sand.u32 %s169, 1
        %s554 = scalar_lea.sflag [#allocation3], %s553
        %s555 = sand.u32 %s169, 1
        %s556 = smul.addr %s555, 16
        %s557 = scalar_lea.vmem [#allocation2], %s556
        %s558 = sand.u32 %s25, 1
        %s559 = scalar_lea.sflag [#allocation5], %s558
        %s560 = sand.u32 %s197, 1
        %s561 = smul.addr %s560, 4
        %s562 = scalar_lea.vmem [#allocation4], %s561
        %s563 = sand.u32 %s25, 1
        %s564 = scalar_lea.sflag [#allocation5], %s563
        %s565 = sand.u32 %s225, 1
        %s566 = smul.addr %s565, 4
        %s567 = scalar_lea.vmem [#allocation6], %s566
        // Predicated region
        $region41: #{tpu_custom_call.1} parent=39 // pred_check
          %p568 = pneg %p179
        $region42: #{tpu_custom_call.1} parent=39 // pred_check_branch
          %570 = sbr.rel (%p568) target = $region44
        $region43: #{tpu_custom_call.1} parent=39 // pred_region
          %s572 = ssub.s32 256, 256
          %573 = vsyncadd %s554, %s572
          %s574 = sadd.s32 %s30, %s29
          %s575 = smul.addr %s574, 128
          %s576 = scalar_lea.hbm %s5, %s575
          %s577 = sshll.u32 %s557, 4
          %s578 = int_to_ptr.vmem [resolvable:$true] %s577
          %583 = dma.vmem_to_hbm [thread:$0]  %s578, 256, %s576, %s554, 128, 256, 8
        $region44: #{tpu_custom_call.1} parent=39 // pred_fallthru
          _
        // Predicated region
        $region45: #{tpu_custom_call.1} parent=39 // pred_check
          %p584 = pneg %p207
        $region46: #{tpu_custom_call.1} parent=39 // pred_check_branch
          %586 = sbr.rel (%p584) target = $region48
        $region47: #{tpu_custom_call.1} parent=39 // pred_region
          %s588 = ssub.s32 64, 64
          %589 = vsyncadd %s559, %s588
          %s590 = sadd.s32 %s30, %s29
          %s591 = smul.addr %s590, 64
          %s592 = scalar_lea.hbm %s6, %s591
          %s594 = sshll.u32 %s562, 4
          %s595 = int_to_ptr.vmem [resolvable:$true] %s594
          %597 = dma.vmem_to_hbm [thread:$0]  %s595, 64, %s592, %s559
        $region48: #{tpu_custom_call.1} parent=39 // pred_fallthru
          _
        // Predicated region
        $region49: #{tpu_custom_call.1} parent=39 // pred_check
          %p598 = pneg %p235
        $region50: #{tpu_custom_call.1} parent=39 // pred_check_branch
          %600 = sbr.rel (%p598) target = $region52
        $region51: #{tpu_custom_call.1} parent=39 // pred_region
          %s602 = ssub.s32 64, 64
          %603 = vsyncadd %s564, %s602
          %s604 = sadd.s32 %s30, %s29
          %s605 = smul.addr %s604, 64
          %s606 = scalar_lea.hbm %s7, %s605
          %s608 = sshll.u32 %s567, 4
          %s609 = int_to_ptr.vmem [resolvable:$true] %s608
          %611 = dma.vmem_to_hbm [thread:$0]  %s609, 64, %s606, %s564
        $region52: #{tpu_custom_call.1} parent=39 // pred_fallthru
          _
      $region40: #{tpu_custom_call.1} parent=5 // pred_fallthru
        _
      %p612 = scmp.le.s32.totalorder 2, %s20
      // Predicated region
      $region53: #{tpu_custom_call.1} parent=5 // pred_check
        %p613 = pneg %p612
      $region54: #{tpu_custom_call.1} parent=5 // pred_check_branch
        %615 = sbr.rel (%p613) target = $region56
      $region55: #{tpu_custom_call.1} parent=5 // pred_region
        %s616 = ssub.s32 %s20, 2
        // Predicated region
        $region57: #{tpu_custom_call.1} parent=55 // pred_check
          %p617 = pneg %p185
        $region58: #{tpu_custom_call.1} parent=55 // pred_check_branch
          %619 = sbr.rel (%p617) target = $region60
        $region59: #{tpu_custom_call.1} parent=55 // pred_region
          %s620 = sand.u32 %s170, 1
          %s621 = scalar_lea.sflag [#allocation3], %s620
          %s622 = sand.u32 %s170, 1
          %s623 = smul.addr %s622, 16
          %s624 = scalar_lea.vmem [#allocation2], %s623
          %625 = dma.done %s621, 256
        $region60: #{tpu_custom_call.1} parent=55 // pred_fallthru
          _
        // Predicated region
        $region61: #{tpu_custom_call.1} parent=55 // pred_check
          %p626 = pneg %p213
        $region62: #{tpu_custom_call.1} parent=55 // pred_check_branch
          %628 = sbr.rel (%p626) target = $region64
        $region63: #{tpu_custom_call.1} parent=55 // pred_region
          %s629 = sand.u32 %s26, 1
          %s630 = scalar_lea.sflag [#allocation5], %s629
          %s631 = sand.u32 %s198, 1
          %s632 = smul.addr %s631, 4
          %s633 = scalar_lea.vmem [#allocation4], %s632
          %634 = dma.done %s630, 64
        $region64: #{tpu_custom_call.1} parent=55 // pred_fallthru
          _
        // Predicated region
        $region65: #{tpu_custom_call.1} parent=55 // pred_check
          %p635 = pneg %p241
        $region66: #{tpu_custom_call.1} parent=55 // pred_check_branch
          %637 = sbr.rel (%p635) target = $region68
        $region67: #{tpu_custom_call.1} parent=55 // pred_region
          %s638 = sand.u32 %s26, 1
          %s639 = scalar_lea.sflag [#allocation5], %s638
          %s640 = sand.u32 %s226, 1
          %s641 = smul.addr %s640, 4
          %s642 = scalar_lea.vmem [#allocation6], %s641
          %643 = dma.done %s639, 64
        $region68: #{tpu_custom_call.1} parent=55 // pred_fallthru
          _
      $region56: #{tpu_custom_call.1} parent=5 // pred_fallthru
        _
    $region6: #{tpu_custom_call.1} parent=1 // loop_footer
      %s24 = sadd.s32 1, %s20
    $region7: #{tpu_custom_call.1} parent=1 // loop_footer_branch
      %19 = sbr.rel target = $region3
    $region8: #{tpu_custom_call.1} parent=1 // loop_exit
      _
    %644 = vsyncpa [#allocation3], 1
    %s645 = scalar_lea.sflag [#allocation3], 1
    %646 = vsyncpa %s645, 1
    %647 = vsyncpa [#allocation5], 1
    %s648 = scalar_lea.sflag [#allocation5], 1
    %649 = vsyncpa %s648, 1

</llo_original>
